<compile_context>
chip_gen: v7x
topology: tpu7x:2x2x1
jax: 0.10.0
libtpu: 0.0.40
codegen_flags: <defaults>
</compile_context>

<pallas_src>
import jax
import jax.numpy as jnp
from jax.experimental import pallas as pl
from jax.experimental.pallas import tpu as pltpu

NUM_MODELS = 3
C = 16    # sequence length (module uses c=1000; small for the demo)
N = 4     # taxa
S = 4     # one-hot channels
K = 16
L = 32
B = 8     # samples per BN group (8 == one f32 sublane tile -> aligned reshapes)
G = 4     # independent BN groups
EPS = 1e-5


def _make_kernel(gps):
    """Fused forward for `gps` BN groups per grid step.

    Row ordering of the conv1 operands is (pos, group, batch) so that
      * conv1 is a single deep-contraction matmul over all groups at once,
      * per-group BN is an aligned reshape (pos, gps, B, width) + sublane reduce,
      * conv2 is a pos-batched matmul on the (pos, gps*B, K) activations.
    """
    RH = gps * B   # rows of the head (one per sample)

    def kernel(xa_ref, xb_ref, w1_ref, w3_ref, w2_ref, w4_ref,
               p1_ref, p2_ref, wc_ref, bc_ref, out_ref, z_ref):
        f32 = jnp.float32
        bf16 = jnp.bfloat16
        p1 = p1_ref[...]   # rows: [b1, g1, be1, b3, g3, be3]  (6, K)
        p2 = p2_ref[...]   # rows: [b2, g2, be2, b4, g4, be4]  (6, L)

        def conv1_bn_relu(x, w, bias, gamma, beta, pos):
            # x: (pos*gps*B, Cin) bf16, w: (Cin, K) bf16 -> (pos, gps*B, K) bf16
            h = jnp.dot(x, w, preferred_element_type=f32) + bias          # (R, K) f32
            h4 = h.reshape(pos, gps, B, K)                                # aligned split
            inv = 1.0 / (pos * B)
            s1 = jnp.sum(h4, axis=0, keepdims=True)                       # (1,gps,B,K)
            mu = jnp.sum(s1, axis=2, keepdims=True) * inv                 # (1,gps,1,K)
            s2 = jnp.sum(h4 * h4, axis=0, keepdims=True)
            ex2 = jnp.sum(s2, axis=2, keepdims=True) * inv
            var = jnp.maximum(ex2 - mu * mu, 0.0)                         # clamp >= 0
            scale = gamma.reshape(1, 1, 1, K) * jax.lax.rsqrt(var + EPS)  # EUP rsqrt
            shift = beta.reshape(1, 1, 1, K) - mu * scale
            h4 = jnp.maximum(h4 * scale + shift, 0.0)
            return h4.reshape(pos, gps * B, K).astype(bf16)               # aligned merge

        def conv2_bn_relu(hp, w, bias, gamma, beta):
            # hp: (pos, gps*B, K) bf16, w: (pos, K, L) bf16 -> (gps*B, L) f32
            y = jnp.einsum('pbk,pkl->pbl', hp, w,
                           preferred_element_type=f32).sum(axis=0) + bias  # (RH, L)
            y3 = y.reshape(gps, B, L)                                      # aligned split
            inv = 1.0 / B
            mu = jnp.sum(y3, axis=1, keepdims=True) * inv                  # (gps,1,L)
            ex2 = jnp.sum(y3 * y3, axis=1, keepdims=True) * inv
            var = jnp.maximum(ex2 - mu * mu, 0.0)
            scale = gamma.reshape(1, 1, L) * jax.lax.rsqrt(var + EPS)
            shift = beta.reshape(1, 1, L) - mu * scale
            y3 = jnp.maximum(y3 * scale + shift, 0.0)
            return y3.reshape(gps * B, L)                                  # f32

        # base_freq: Conv2d(S,K,(C,1)) -> BN -> ReLU -> Conv2d(K,L,(1,N)) -> BN -> ReLU
        h1 = conv1_bn_relu(xa_ref[...], w1_ref[...], p1[0:1], p1[1:2], p1[2:3], N)
        y = conv2_bn_relu(h1, w2_ref[...], p2[0:1], p2[1:2], p2[2:3])
        # rate_mx : Conv2d(S,K,(1,N)) -> BN -> ReLU -> Conv2d(K,L,(C,1)) -> BN -> ReLU
        h3 = conv1_bn_relu(xb_ref[...], w3_ref[...], p1[3:4], p1[4:5], p1[5:6], C)
        xo = conv2_bn_relu(h3, w4_ref[...], p2[3:4], p2[4:5], p2[5:6])

        # AdaptiveAvgPool2d(1) on a 1x1 map is identity.
        # classifier on cat([rate, base], 1): concat into one VMEM scratch, single dot.
        z_ref[:, 0:L] = xo
        z_ref[:, L:2 * L] = y
        out_ref[...] = (jnp.dot(z_ref[...], wc_ref[...],
                                preferred_element_type=f32) + bc_ref[...])

    return kernel


def model_forward(x, params):
    """x: (G, B, S, C, N) one-hot sequences.  G independent BN groups; each group gets
    its own training-mode BN statistics (== G separate calls of the module).
    Returns (G, B, NUM_MODELS) logits."""
    (w1, b1, g1, be1, w2, b2, g2, be2,
     w3, b3, g3, be3, w4, b4, g4, be4, wc, bc) = params
    Gn = x.shape[0]
    assert x.shape == (Gn, B, S, C, N)
    bf16 = jnp.bfloat16

    # grid of 2 "parallel" super-steps when possible (feeds both v7x TensorCores).
    nsteps = 2 if (Gn % 2 == 0 and Gn >= 2) else 1
    gps = Gn // nsteps
    RA = N * gps * B     # base conv1 rows per step, ordered (w, group, b)
    RB = C * gps * B     # rate conv1 rows per step, ordered (h, group, b)
    RH = gps * B

    # ---- layout plumbing (fused by jit; x is one-hot so the bf16 cast is exact) ----
    xs = x.reshape(nsteps, gps, B, S, C, N)
    xa = xs.transpose(0, 5, 1, 2, 3, 4).reshape(nsteps, RA, S * C).astype(bf16)
    xb = xs.transpose(0, 4, 1, 2, 3, 5).reshape(nsteps, RB, S * N).astype(bf16)

    w1p = w1[:, :, :, 0].reshape(K, S * C).T.astype(bf16)                 # (S*C, K)
    w3p = w3[:, :, 0, :].reshape(K, S * N).T.astype(bf16)                 # (S*N, K)
    w2a = jnp.transpose(w2[:, :, 0, :], (2, 1, 0)).astype(bf16)           # (N, K, L)
    w4a = jnp.transpose(w4[:, :, :, 0], (2, 1, 0)).astype(bf16)           # (C, K, L)

    # (bias, gamma, beta) packs: row-sliced (sublane) inside the kernel.
    p1 = jnp.stack([b1, g1, be1, b3, g3, be3])                            # (6, K)
    p2 = jnp.stack([b2, g2, be2, b4, g4, be4])                            # (6, L)
    wcT = wc.T                                                            # (2L, M)
    bcr = bc.reshape(1, NUM_MODELS)

    out = pl.pallas_call(
        _make_kernel(gps),
        grid=(nsteps,),
        in_specs=[
            pl.BlockSpec((None, RA, S * C), lambda st: (st, 0, 0)),
            pl.BlockSpec((None, RB, S * N), lambda st: (st, 0, 0)),
            pl.BlockSpec((S * C, K), lambda st: (0, 0)),
            pl.BlockSpec((S * N, K), lambda st: (0, 0)),
            pl.BlockSpec((N, K, L), lambda st: (0, 0, 0)),
            pl.BlockSpec((C, K, L), lambda st: (0, 0, 0)),
            pl.BlockSpec((6, K), lambda st: (0, 0)),
            pl.BlockSpec((6, L), lambda st: (0, 0)),
            pl.BlockSpec((2 * L, NUM_MODELS), lambda st: (0, 0)),
            pl.BlockSpec((1, NUM_MODELS), lambda st: (0, 0)),
        ],
        out_specs=pl.BlockSpec((None, RH, NUM_MODELS), lambda st: (st, 0, 0)),
        out_shape=jax.ShapeDtypeStruct((nsteps, RH, NUM_MODELS), jnp.float32),
        scratch_shapes=[pltpu.VMEM((RH, 2 * L), jnp.float32)],
        compiler_params=pltpu.CompilerParams(dimension_semantics=("parallel",)),
    )(xa, xb, w1p, w3p, w2a, w4a, p1, p2, wcT, bcr)

    return out.reshape(Gn, B, NUM_MODELS)


def reference_forward(x, params):
    """Pure-JAX reference: G independent PyTorch-style forwards (training-mode BN)
    with the same precision policy as the kernel (conv-matmul operands rounded to
    bf16, f32 accumulation; x is one-hot so its bf16 cast is exact)."""
    (w1, b1, g1, be1, w2, b2, g2, be2,
     w3, b3, g3, be3, w4, b4, g4, be4, wc, bc) = params
    bf = lambda a: a.astype(jnp.bfloat16)
    f32 = jnp.float32

    def bn_relu(h, axes, g, be, shp):
        mu = h.mean(axis=axes, keepdims=True)
        var = jnp.maximum((h * h).mean(axis=axes, keepdims=True) - mu * mu, 0.0)
        scale = g.reshape(shp) * jax.lax.rsqrt(var + EPS)
        return jnp.maximum((h - mu) * scale + be.reshape(shp), 0.0)

    def one_group(xg):                                                # (B, S, C, N)
        # base_freq
        h1 = jnp.einsum('bihw,oih->bow', bf(xg), bf(w1[:, :, :, 0]),
                        preferred_element_type=f32) + b1[None, :, None]
        h1 = bn_relu(h1, (0, 2), g1, be1, (1, K, 1))
        y = jnp.einsum('biw,oiw->bo', bf(h1), bf(w2[:, :, 0, :]),
                       preferred_element_type=f32) + b2[None, :]
        y = bn_relu(y, (0,), g2, be2, (1, L))
        # rate_mx
        h3 = jnp.einsum('bihw,oiw->boh', bf(xg), bf(w3[:, :, 0, :]),
                        preferred_element_type=f32) + b3[None, :, None]
        h3 = bn_relu(h3, (0, 2), g3, be3, (1, K, 1))
        xo = jnp.einsum('bih,oih->bo', bf(h3), bf(w4[:, :, :, 0]),
                        preferred_element_type=f32) + b4[None, :]
        xo = bn_relu(xo, (0,), g4, be4, (1, L))
        # AdaptiveAvgPool2d(1) on 1x1 spatial is identity; classifier on cat([rate, base]).
        z = jnp.concatenate([xo, y], axis=1)
        return z @ wc.T + bc[None, :]

    return jax.vmap(one_group)(x)


if __name__ == "__main__":
    key = jax.random.PRNGKey(0)
    ks = jax.random.split(key, 20)
    init = lambda k, shape: 0.1 * jax.random.normal(k, shape, jnp.float32)

    w1 = init(ks[0], (K, S, C, 1)); b1 = init(ks[1], (K,))
    g1 = 1.0 + 0.1 * jax.random.normal(ks[2], (K,)); be1 = init(ks[3], (K,))
    w2 = init(ks[4], (L, K, 1, N)); b2 = init(ks[5], (L,))
    g2 = 1.0 + 0.1 * jax.random.normal(ks[6], (L,)); be2 = init(ks[7], (L,))
    w3 = init(ks[8], (K, S, 1, N)); b3 = init(ks[9], (K,))
    g3 = 1.0 + 0.1 * jax.random.normal(ks[10], (K,)); be3 = init(ks[11], (K,))
    w4 = init(ks[12], (L, K, C, 1)); b4 = init(ks[13], (L,))
    g4 = 1.0 + 0.1 * jax.random.normal(ks[14], (L,)); be4 = init(ks[15], (L,))
    wc = init(ks[16], (NUM_MODELS, 2 * L)); bc = init(ks[17], (NUM_MODELS,))
    params = (w1, b1, g1, be1, w2, b2, g2, be2,
              w3, b3, g3, be3, w4, b4, g4, be4, wc, bc)

    # G independent one-hot encoded batches, NCHW per group: (G, B, S, C, N)
    idx = jax.random.randint(ks[18], (G, B, C, N), 0, S)
    x = jax.nn.one_hot(idx, S, axis=2).astype(jnp.float32)

    fwd = jax.jit(model_forward)
    out = jax.block_until_ready(fwd(x, params))
    ref = reference_forward(x, params)
    assert out.shape == (G, B, NUM_MODELS)
    # Kernel and reference share the same bf16 rounding points; BN over a small batch
    # amplifies accumulation-order differences, hence 1e-2 rather than f32 tolerances.
    assert jnp.allclose(out, ref, atol=1e-2, rtol=1e-2), (out, ref)
    print("KERNEL_OK")
</pallas_src>

<mosaic_0001>
module attributes {stable_mosaic.version = 11 : i64} {
  func.func @kernel(%arg0: i32, %arg1: memref<1x64x64xbf16, #tpu.memory_space<vmem>>, %arg2: memref<1x256x16xbf16, #tpu.memory_space<vmem>>, %arg3: memref<64x16xbf16, #tpu.memory_space<vmem>>, %arg4: memref<16x16xbf16, #tpu.memory_space<vmem>>, %arg5: memref<4x16x32xbf16, #tpu.memory_space<vmem>>, %arg6: memref<16x16x32xbf16, #tpu.memory_space<vmem>>, %arg7: memref<6x16xf32, #tpu.memory_space<vmem>>, %arg8: memref<6x32xf32, #tpu.memory_space<vmem>>, %arg9: memref<64x3xf32, #tpu.memory_space<vmem>>, %arg10: memref<1x3xf32, #tpu.memory_space<vmem>>, %arg11: memref<1x16x3xf32, #tpu.memory_space<vmem>>, %arg12: memref<16x64xf32, #tpu.memory_space<vmem>>) attributes {dimension_semantics = [#tpu.dimension_semantics<parallel>], iteration_bounds = array<i64: 2>, scalar_prefetch = 0 : i64, scratch_operands = 1 : i64, tpu.core_type = #tpu.core_type<tc>, window_params = [{transform_indices = @transform_0, window_bounds = array<i64: 1, 64, 64>}, {transform_indices = @transform_1, window_bounds = array<i64: 1, 256, 16>}, {pipeline_mode = #tpu.pipeline_mode<synchronous>, transform_indices = @transform_2, window_bounds = array<i64: 64, 16>}, {pipeline_mode = #tpu.pipeline_mode<synchronous>, transform_indices = @transform_3, window_bounds = array<i64: 16, 16>}, {pipeline_mode = #tpu.pipeline_mode<synchronous>, transform_indices = @transform_4, window_bounds = array<i64: 4, 16, 32>}, {pipeline_mode = #tpu.pipeline_mode<synchronous>, transform_indices = @transform_5, window_bounds = array<i64: 16, 16, 32>}, {pipeline_mode = #tpu.pipeline_mode<synchronous>, transform_indices = @transform_6, window_bounds = array<i64: 6, 16>}, {pipeline_mode = #tpu.pipeline_mode<synchronous>, transform_indices = @transform_7, window_bounds = array<i64: 6, 32>}, {pipeline_mode = #tpu.pipeline_mode<synchronous>, transform_indices = @transform_8, window_bounds = array<i64: 64, 3>}, {pipeline_mode = #tpu.pipeline_mode<synchronous>, transform_indices = @transform_9, window_bounds = array<i64: 1, 3>}, {transform_indices = @transform_10, window_bounds = array<i64: 1, 16, 3>}]} {
    %c0 = arith.constant 0 : index
    %c0_0 = arith.constant 0 : index
    %0 = vector.load %arg7[%c0, %c0_0] : memref<6x16xf32, #tpu.memory_space<vmem>>, vector<6x16xf32>
    %c0_1 = arith.constant 0 : index
    %c0_2 = arith.constant 0 : index
    %1 = vector.load %arg8[%c0_1, %c0_2] : memref<6x32xf32, #tpu.memory_space<vmem>>, vector<6x32xf32>
    %c0_3 = arith.constant 0 : index
    %c0_4 = arith.constant 0 : index
    %c0_5 = arith.constant 0 : index
    %2 = vector.load %arg1[%c0_3, %c0_4, %c0_5] : memref<1x64x64xbf16, #tpu.memory_space<vmem>>, vector<1x64x64xbf16>
    %3 = vector.shape_cast %2 : vector<1x64x64xbf16> to vector<64x64xbf16>
    %c0_6 = arith.constant 0 : index
    %c0_7 = arith.constant 0 : index
    %4 = vector.load %arg3[%c0_6, %c0_7] : memref<64x16xbf16, #tpu.memory_space<vmem>>, vector<64x16xbf16>
    %5 = vector.extract_strided_slice %0 {offsets = [0, 0], sizes = [1, 16], strides = [1, 1]} : vector<6x16xf32> to vector<1x16xf32>
    %6 = vector.extract_strided_slice %0 {offsets = [1, 0], sizes = [1, 16], strides = [1, 1]} : vector<6x16xf32> to vector<1x16xf32>
    %7 = vector.extract_strided_slice %0 {offsets = [2, 0], sizes = [1, 16], strides = [1, 1]} : vector<6x16xf32> to vector<1x16xf32>
    %cst = arith.constant dense<0.000000e+00> : vector<64x16xf32>
    %8 = tpu.matmul %3, %4, %cst {dimension_numbers = #tpu.dot_dimension_numbers<[1], [0], [0], [1], [0, 0, 1, 1], [], []>} : vector<64x64xbf16>, vector<64x16xbf16>, vector<64x16xf32> -> vector<64x16xf32>
    %9 = vector.broadcast %5 : vector<1x16xf32> to vector<64x16xf32>
    %10 = arith.addf %8, %9 : vector<64x16xf32>
    %11 = vector.shape_cast %10 : vector<64x16xf32> to vector<4x2x8x16xf32>
    %cst_8 = arith.constant dense<0.000000e+00> : vector<2x8x16xf32>
    %12 = vector.multi_reduction <add>, %11, %cst_8 [0] : vector<4x2x8x16xf32> to vector<2x8x16xf32>
    %13 = vector.shape_cast %12 : vector<2x8x16xf32> to vector<1x2x8x16xf32>
    %cst_9 = arith.constant dense<0.000000e+00> : vector<1x2x16xf32>
    %14 = vector.multi_reduction <add>, %13, %cst_9 [2] : vector<1x2x8x16xf32> to vector<1x2x16xf32>
    %15 = vector.shape_cast %14 : vector<1x2x16xf32> to vector<1x2x1x16xf32>
    %cst_10 = arith.constant 3.125000e-02 : f32
    %16 = vector.broadcast %cst_10 : f32 to vector<1x2x1x16xf32>
    %17 = arith.mulf %15, %16 : vector<1x2x1x16xf32>
    %18 = arith.mulf %11, %11 : vector<4x2x8x16xf32>
    %cst_11 = arith.constant dense<0.000000e+00> : vector<2x8x16xf32>
    %19 = vector.multi_reduction <add>, %18, %cst_11 [0] : vector<4x2x8x16xf32> to vector<2x8x16xf32>
    %20 = vector.shape_cast %19 : vector<2x8x16xf32> to vector<1x2x8x16xf32>
    %cst_12 = arith.constant dense<0.000000e+00> : vector<1x2x16xf32>
    %21 = vector.multi_reduction <add>, %20, %cst_12 [2] : vector<1x2x8x16xf32> to vector<1x2x16xf32>
    %22 = vector.shape_cast %21 : vector<1x2x16xf32> to vector<1x2x1x16xf32>
    %cst_13 = arith.constant 3.125000e-02 : f32
    %23 = vector.broadcast %cst_13 : f32 to vector<1x2x1x16xf32>
    %24 = arith.mulf %22, %23 : vector<1x2x1x16xf32>
    %25 = arith.mulf %17, %17 : vector<1x2x1x16xf32>
    %26 = arith.subf %24, %25 : vector<1x2x1x16xf32>
    %cst_14 = arith.constant 0.000000e+00 : f32
    %27 = vector.broadcast %cst_14 : f32 to vector<1x2x1x16xf32>
    %28 = arith.maximumf %26, %27 : vector<1x2x1x16xf32>
    %29 = vector.shape_cast %6 : vector<1x16xf32> to vector<1x1x1x16xf32>
    %cst_15 = arith.constant 9.99999974E-6 : f32
    %30 = vector.broadcast %cst_15 : f32 to vector<1x2x1x16xf32>
    %31 = arith.addf %28, %30 : vector<1x2x1x16xf32>
    %32 = math.rsqrt %31 : vector<1x2x1x16xf32>
    %33 = vector.broadcast %29 : vector<1x1x1x16xf32> to vector<1x2x1x16xf32>
    %34 = arith.mulf %33, %32 : vector<1x2x1x16xf32>
    %35 = vector.shape_cast %7 : vector<1x16xf32> to vector<1x1x1x16xf32>
    %36 = arith.mulf %17, %34 : vector<1x2x1x16xf32>
    %37 = vector.broadcast %35 : vector<1x1x1x16xf32> to vector<1x2x1x16xf32>
    %38 = arith.subf %37, %36 : vector<1x2x1x16xf32>
    %39 = vector.broadcast %34 : vector<1x2x1x16xf32> to vector<4x2x8x16xf32>
    %40 = arith.mulf %11, %39 : vector<4x2x8x16xf32>
    %41 = vector.broadcast %38 : vector<1x2x1x16xf32> to vector<4x2x8x16xf32>
    %42 = arith.addf %40, %41 : vector<4x2x8x16xf32>
    %cst_16 = arith.constant 0.000000e+00 : f32
    %43 = vector.broadcast %cst_16 : f32 to vector<4x2x8x16xf32>
    %44 = arith.maximumf %42, %43 : vector<4x2x8x16xf32>
    %45 = vector.shape_cast %44 : vector<4x2x8x16xf32> to vector<4x16x16xf32>
    %46 = arith.truncf %45 : vector<4x16x16xf32> to vector<4x16x16xbf16>
    %c0_17 = arith.constant 0 : index
    %c0_18 = arith.constant 0 : index
    %c0_19 = arith.constant 0 : index
    %47 = vector.load %arg5[%c0_17, %c0_18, %c0_19] : memref<4x16x32xbf16, #tpu.memory_space<vmem>>, vector<4x16x32xbf16>
    %48 = vector.extract_strided_slice %1 {offsets = [0, 0], sizes = [1, 32], strides = [1, 1]} : vector<6x32xf32> to vector<1x32xf32>
    %49 = vector.extract_strided_slice %1 {offsets = [1, 0], sizes = [1, 32], strides = [1, 1]} : vector<6x32xf32> to vector<1x32xf32>
    %50 = vector.extract_strided_slice %1 {offsets = [2, 0], sizes = [1, 32], strides = [1, 1]} : vector<6x32xf32> to vector<1x32xf32>
    "tpu.trace_start"() <{level = 10 : i32, message = "pbk,pkl->pbl"}> : () -> ()
    %cst_20 = arith.constant dense<0.000000e+00> : vector<4x16x32xf32>
    %51 = tpu.matmul %46, %47, %cst_20 {dimension_numbers = #tpu.dot_dimension_numbers<[2], [1], [1], [2], [0, 0, 0, 1, 1, 2], [0], [0]>} : vector<4x16x16xbf16>, vector<4x16x32xbf16>, vector<4x16x32xf32> -> vector<4x16x32xf32>
    "tpu.trace_stop"() : () -> ()
    %cst_21 = arith.constant dense<0.000000e+00> : vector<16x32xf32>
    %52 = vector.multi_reduction <add>, %51, %cst_21 [0] : vector<4x16x32xf32> to vector<16x32xf32>
    %53 = vector.broadcast %48 : vector<1x32xf32> to vector<16x32xf32>
    %54 = arith.addf %52, %53 : vector<16x32xf32>
    %55 = vector.shape_cast %54 : vector<16x32xf32> to vector<2x8x32xf32>
    %cst_22 = arith.constant dense<0.000000e+00> : vector<2x32xf32>
    %56 = vector.multi_reduction <add>, %55, %cst_22 [1] : vector<2x8x32xf32> to vector<2x32xf32>
    %57 = vector.shape_cast %56 : vector<2x32xf32> to vector<2x1x32xf32>
    %cst_23 = arith.constant 1.250000e-01 : f32
    %58 = vector.broadcast %cst_23 : f32 to vector<2x1x32xf32>
    %59 = arith.mulf %57, %58 : vector<2x1x32xf32>
    %60 = arith.mulf %55, %55 : vector<2x8x32xf32>
    %cst_24 = arith.constant dense<0.000000e+00> : vector<2x32xf32>
    %61 = vector.multi_reduction <add>, %60, %cst_24 [1] : vector<2x8x32xf32> to vector<2x32xf32>
    %62 = vector.shape_cast %61 : vector<2x32xf32> to vector<2x1x32xf32>
    %cst_25 = arith.constant 1.250000e-01 : f32
    %63 = vector.broadcast %cst_25 : f32 to vector<2x1x32xf32>
    %64 = arith.mulf %62, %63 : vector<2x1x32xf32>
    %65 = arith.mulf %59, %59 : vector<2x1x32xf32>
    %66 = arith.subf %64, %65 : vector<2x1x32xf32>
    %cst_26 = arith.constant 0.000000e+00 : f32
    %67 = vector.broadcast %cst_26 : f32 to vector<2x1x32xf32>
    %68 = arith.maximumf %66, %67 : vector<2x1x32xf32>
    %69 = vector.shape_cast %49 : vector<1x32xf32> to vector<1x1x32xf32>
    %cst_27 = arith.constant 9.99999974E-6 : f32
    %70 = vector.broadcast %cst_27 : f32 to vector<2x1x32xf32>
    %71 = arith.addf %68, %70 : vector<2x1x32xf32>
    %72 = math.rsqrt %71 : vector<2x1x32xf32>
    %73 = vector.broadcast %69 : vector<1x1x32xf32> to vector<2x1x32xf32>
    %74 = arith.mulf %73, %72 : vector<2x1x32xf32>
    %75 = vector.shape_cast %50 : vector<1x32xf32> to vector<1x1x32xf32>
    %76 = arith.mulf %59, %74 : vector<2x1x32xf32>
    %77 = vector.broadcast %75 : vector<1x1x32xf32> to vector<2x1x32xf32>
    %78 = arith.subf %77, %76 : vector<2x1x32xf32>
    %79 = vector.broadcast %74 : vector<2x1x32xf32> to vector<2x8x32xf32>
    %80 = arith.mulf %55, %79 : vector<2x8x32xf32>
    %81 = vector.broadcast %78 : vector<2x1x32xf32> to vector<2x8x32xf32>
    %82 = arith.addf %80, %81 : vector<2x8x32xf32>
    %cst_28 = arith.constant 0.000000e+00 : f32
    %83 = vector.broadcast %cst_28 : f32 to vector<2x8x32xf32>
    %84 = arith.maximumf %82, %83 : vector<2x8x32xf32>
    %85 = vector.shape_cast %84 : vector<2x8x32xf32> to vector<16x32xf32>
    %c0_29 = arith.constant 0 : index
    %c0_30 = arith.constant 0 : index
    %c0_31 = arith.constant 0 : index
    %86 = vector.load %arg2[%c0_29, %c0_30, %c0_31] : memref<1x256x16xbf16, #tpu.memory_space<vmem>>, vector<1x256x16xbf16>
    %87 = vector.shape_cast %86 : vector<1x256x16xbf16> to vector<256x16xbf16>
    %c0_32 = arith.constant 0 : index
    %c0_33 = arith.constant 0 : index
    %88 = vector.load %arg4[%c0_32, %c0_33] : memref<16x16xbf16, #tpu.memory_space<vmem>>, vector<16x16xbf16>
    %89 = vector.extract_strided_slice %0 {offsets = [3, 0], sizes = [1, 16], strides = [1, 1]} : vector<6x16xf32> to vector<1x16xf32>
    %90 = vector.extract_strided_slice %0 {offsets = [4, 0], sizes = [1, 16], strides = [1, 1]} : vector<6x16xf32> to vector<1x16xf32>
    %91 = vector.extract_strided_slice %0 {offsets = [5, 0], sizes = [1, 16], strides = [1, 1]} : vector<6x16xf32> to vector<1x16xf32>
    %cst_34 = arith.constant dense<0.000000e+00> : vector<256x16xf32>
    %92 = tpu.matmul %87, %88, %cst_34 {dimension_numbers = #tpu.dot_dimension_numbers<[1], [0], [0], [1], [0, 0, 1, 1], [], []>} : vector<256x16xbf16>, vector<16x16xbf16>, vector<256x16xf32> -> vector<256x16xf32>
    %93 = vector.broadcast %89 : vector<1x16xf32> to vector<256x16xf32>
    %94 = arith.addf %92, %93 : vector<256x16xf32>
    %95 = vector.shape_cast %94 : vector<256x16xf32> to vector<16x2x8x16xf32>
    %cst_35 = arith.constant dense<0.000000e+00> : vector<2x8x16xf32>
    %96 = vector.multi_reduction <add>, %95, %cst_35 [0] : vector<16x2x8x16xf32> to vector<2x8x16xf32>
    %97 = vector.shape_cast %96 : vector<2x8x16xf32> to vector<1x2x8x16xf32>
    %cst_36 = arith.constant dense<0.000000e+00> : vector<1x2x16xf32>
    %98 = vector.multi_reduction <add>, %97, %cst_36 [2] : vector<1x2x8x16xf32> to vector<1x2x16xf32>
    %99 = vector.shape_cast %98 : vector<1x2x16xf32> to vector<1x2x1x16xf32>
    %cst_37 = arith.constant 7.812500e-03 : f32
    %100 = vector.broadcast %cst_37 : f32 to vector<1x2x1x16xf32>
    %101 = arith.mulf %99, %100 : vector<1x2x1x16xf32>
    %102 = arith.mulf %95, %95 : vector<16x2x8x16xf32>
    %cst_38 = arith.constant dense<0.000000e+00> : vector<2x8x16xf32>
    %103 = vector.multi_reduction <add>, %102, %cst_38 [0] : vector<16x2x8x16xf32> to vector<2x8x16xf32>
    %104 = vector.shape_cast %103 : vector<2x8x16xf32> to vector<1x2x8x16xf32>
    %cst_39 = arith.constant dense<0.000000e+00> : vector<1x2x16xf32>
    %105 = vector.multi_reduction <add>, %104, %cst_39 [2] : vector<1x2x8x16xf32> to vector<1x2x16xf32>
    %106 = vector.shape_cast %105 : vector<1x2x16xf32> to vector<1x2x1x16xf32>
    %cst_40 = arith.constant 7.812500e-03 : f32
    %107 = vector.broadcast %cst_40 : f32 to vector<1x2x1x16xf32>
    %108 = arith.mulf %106, %107 : vector<1x2x1x16xf32>
    %109 = arith.mulf %101, %101 : vector<1x2x1x16xf32>
    %110 = arith.subf %108, %109 : vector<1x2x1x16xf32>
    %cst_41 = arith.constant 0.000000e+00 : f32
    %111 = vector.broadcast %cst_41 : f32 to vector<1x2x1x16xf32>
    %112 = arith.maximumf %110, %111 : vector<1x2x1x16xf32>
    %113 = vector.shape_cast %90 : vector<1x16xf32> to vector<1x1x1x16xf32>
    %cst_42 = arith.constant 9.99999974E-6 : f32
    %114 = vector.broadcast %cst_42 : f32 to vector<1x2x1x16xf32>
    %115 = arith.addf %112, %114 : vector<1x2x1x16xf32>
    %116 = math.rsqrt %115 : vector<1x2x1x16xf32>
    %117 = vector.broadcast %113 : vector<1x1x1x16xf32> to vector<1x2x1x16xf32>
    %118 = arith.mulf %117, %116 : vector<1x2x1x16xf32>
    %119 = vector.shape_cast %91 : vector<1x16xf32> to vector<1x1x1x16xf32>
    %120 = arith.mulf %101, %118 : vector<1x2x1x16xf32>
    %121 = vector.broadcast %119 : vector<1x1x1x16xf32> to vector<1x2x1x16xf32>
    %122 = arith.subf %121, %120 : vector<1x2x1x16xf32>
    %123 = vector.broadcast %118 : vector<1x2x1x16xf32> to vector<16x2x8x16xf32>
    %124 = arith.mulf %95, %123 : vector<16x2x8x16xf32>
    %125 = vector.broadcast %122 : vector<1x2x1x16xf32> to vector<16x2x8x16xf32>
    %126 = arith.addf %124, %125 : vector<16x2x8x16xf32>
    %cst_43 = arith.constant 0.000000e+00 : f32
    %127 = vector.broadcast %cst_43 : f32 to vector<16x2x8x16xf32>
    %128 = arith.maximumf %126, %127 : vector<16x2x8x16xf32>
    %129 = vector.shape_cast %128 : vector<16x2x8x16xf32> to vector<16x16x16xf32>
    %130 = arith.truncf %129 : vector<16x16x16xf32> to vector<16x16x16xbf16>
    %c0_44 = arith.constant 0 : index
    %c0_45 = arith.constant 0 : index
    %c0_46 = arith.constant 0 : index
    %131 = vector.load %arg6[%c0_44, %c0_45, %c0_46] : memref<16x16x32xbf16, #tpu.memory_space<vmem>>, vector<16x16x32xbf16>
    %132 = vector.extract_strided_slice %1 {offsets = [3, 0], sizes = [1, 32], strides = [1, 1]} : vector<6x32xf32> to vector<1x32xf32>
    %133 = vector.extract_strided_slice %1 {offsets = [4, 0], sizes = [1, 32], strides = [1, 1]} : vector<6x32xf32> to vector<1x32xf32>
    %134 = vector.extract_strided_slice %1 {offsets = [5, 0], sizes = [1, 32], strides = [1, 1]} : vector<6x32xf32> to vector<1x32xf32>
    "tpu.trace_start"() <{level = 10 : i32, message = "pbk,pkl->pbl"}> : () -> ()
    %cst_47 = arith.constant dense<0.000000e+00> : vector<16x16x32xf32>
    %135 = tpu.matmul %130, %131, %cst_47 {dimension_numbers = #tpu.dot_dimension_numbers<[2], [1], [1], [2], [0, 0, 0, 1, 1, 2], [0], [0]>} : vector<16x16x16xbf16>, vector<16x16x32xbf16>, vector<16x16x32xf32> -> vector<16x16x32xf32>
    "tpu.trace_stop"() : () -> ()
    %cst_48 = arith.constant dense<0.000000e+00> : vector<16x32xf32>
    %136 = vector.multi_reduction <add>, %135, %cst_48 [0] : vector<16x16x32xf32> to vector<16x32xf32>
    %137 = vector.broadcast %132 : vector<1x32xf32> to vector<16x32xf32>
    %138 = arith.addf %136, %137 : vector<16x32xf32>
    %139 = vector.shape_cast %138 : vector<16x32xf32> to vector<2x8x32xf32>
    %cst_49 = arith.constant dense<0.000000e+00> : vector<2x32xf32>
    %140 = vector.multi_reduction <add>, %139, %cst_49 [1] : vector<2x8x32xf32> to vector<2x32xf32>
    %141 = vector.shape_cast %140 : vector<2x32xf32> to vector<2x1x32xf32>
    %cst_50 = arith.constant 1.250000e-01 : f32
    %142 = vector.broadcast %cst_50 : f32 to vector<2x1x32xf32>
    %143 = arith.mulf %141, %142 : vector<2x1x32xf32>
    %144 = arith.mulf %139, %139 : vector<2x8x32xf32>
    %cst_51 = arith.constant dense<0.000000e+00> : vector<2x32xf32>
    %145 = vector.multi_reduction <add>, %144, %cst_51 [1] : vector<2x8x32xf32> to vector<2x32xf32>
    %146 = vector.shape_cast %145 : vector<2x32xf32> to vector<2x1x32xf32>
    %cst_52 = arith.constant 1.250000e-01 : f32
    %147 = vector.broadcast %cst_52 : f32 to vector<2x1x32xf32>
    %148 = arith.mulf %146, %147 : vector<2x1x32xf32>
    %149 = arith.mulf %143, %143 : vector<2x1x32xf32>
    %150 = arith.subf %148, %149 : vector<2x1x32xf32>
    %cst_53 = arith.constant 0.000000e+00 : f32
    %151 = vector.broadcast %cst_53 : f32 to vector<2x1x32xf32>
    %152 = arith.maximumf %150, %151 : vector<2x1x32xf32>
    %153 = vector.shape_cast %133 : vector<1x32xf32> to vector<1x1x32xf32>
    %cst_54 = arith.constant 9.99999974E-6 : f32
    %154 = vector.broadcast %cst_54 : f32 to vector<2x1x32xf32>
    %155 = arith.addf %152, %154 : vector<2x1x32xf32>
    %156 = math.rsqrt %155 : vector<2x1x32xf32>
    %157 = vector.broadcast %153 : vector<1x1x32xf32> to vector<2x1x32xf32>
    %158 = arith.mulf %157, %156 : vector<2x1x32xf32>
    %159 = vector.shape_cast %134 : vector<1x32xf32> to vector<1x1x32xf32>
    %160 = arith.mulf %143, %158 : vector<2x1x32xf32>
    %161 = vector.broadcast %159 : vector<1x1x32xf32> to vector<2x1x32xf32>
    %162 = arith.subf %161, %160 : vector<2x1x32xf32>
    %163 = vector.broadcast %158 : vector<2x1x32xf32> to vector<2x8x32xf32>
    %164 = arith.mulf %139, %163 : vector<2x8x32xf32>
    %165 = vector.broadcast %162 : vector<2x1x32xf32> to vector<2x8x32xf32>
    %166 = arith.addf %164, %165 : vector<2x8x32xf32>
    %cst_55 = arith.constant 0.000000e+00 : f32
    %167 = vector.broadcast %cst_55 : f32 to vector<2x8x32xf32>
    %168 = arith.maximumf %166, %167 : vector<2x8x32xf32>
    %169 = vector.shape_cast %168 : vector<2x8x32xf32> to vector<16x32xf32>
    %c0_56 = arith.constant 0 : index
    %c0_57 = arith.constant 0 : index
    %170 = vector.load %arg12[%c0_56, %c0_57] : memref<16x64xf32, #tpu.memory_space<vmem>>, vector<16x32xf32>
    tpu.vector_store %arg12[%c0_56, %c0_57], %169 {strides = array<i32>} : memref<16x64xf32, #tpu.memory_space<vmem>>, vector<16x32xf32>,
    %c0_58 = arith.constant 0 : index
    %c32 = arith.constant 32 : index
    %171 = vector.load %arg12[%c0_58, %c32] : memref<16x64xf32, #tpu.memory_space<vmem>>, vector<16x32xf32>
    tpu.vector_store %arg12[%c0_58, %c32], %85 {strides = array<i32>} : memref<16x64xf32, #tpu.memory_space<vmem>>, vector<16x32xf32>,
    %c0_59 = arith.constant 0 : index
    %c0_60 = arith.constant 0 : index
    %172 = vector.load %arg12[%c0_59, %c0_60] : memref<16x64xf32, #tpu.memory_space<vmem>>, vector<16x64xf32>
    %c0_61 = arith.constant 0 : index
    %c0_62 = arith.constant 0 : index
    %173 = vector.load %arg9[%c0_61, %c0_62] : memref<64x3xf32, #tpu.memory_space<vmem>>, vector<64x3xf32>
    %cst_63 = arith.constant dense<0.000000e+00> : vector<16x3xf32>
    %174 = tpu.matmul %172, %173, %cst_63 {dimension_numbers = #tpu.dot_dimension_numbers<[1], [0], [0], [1], [0, 0, 1, 1], [], []>} : vector<16x64xf32>, vector<64x3xf32>, vector<16x3xf32> -> vector<16x3xf32>
    %c0_64 = arith.constant 0 : index
    %c0_65 = arith.constant 0 : index
    %175 = vector.load %arg10[%c0_64, %c0_65] : memref<1x3xf32, #tpu.memory_space<vmem>>, vector<1x3xf32>
    %176 = vector.broadcast %175 : vector<1x3xf32> to vector<16x3xf32>
    %177 = arith.addf %174, %176 : vector<16x3xf32>
    %c0_66 = arith.constant 0 : index
    %c0_67 = arith.constant 0 : index
    %c0_68 = arith.constant 0 : index
    %178 = vector.load %arg11[%c0_66, %c0_67, %c0_68] : memref<1x16x3xf32, #tpu.memory_space<vmem>>, vector<1x16x3xf32>
    %179 = vector.shape_cast %178 : vector<1x16x3xf32> to vector<16x3xf32>
    %180 = vector.shape_cast %177 : vector<16x3xf32> to vector<1x16x3xf32>
    tpu.vector_store %arg11[%c0_66, %c0_67, %c0_68], %180 {strides = array<i32>} : memref<1x16x3xf32, #tpu.memory_space<vmem>>, vector<1x16x3xf32>,
    return
  }
  func.func @transform_0(%arg0: i32) -> (i32, i32, i32) {
    %c0_i32 = arith.constant 0 : i32
    %c0_i32_0 = arith.constant 0 : i32
    %c0_i32_1 = arith.constant 0 : i32
    return %arg0, %c0_i32, %c0_i32_0 : i32, i32, i32
  }
  func.func @transform_1(%arg0: i32) -> (i32, i32, i32) {
    %c0_i32 = arith.constant 0 : i32
    %c0_i32_0 = arith.constant 0 : i32
    %c0_i32_1 = arith.constant 0 : i32
    return %arg0, %c0_i32, %c0_i32_0 : i32, i32, i32
  }
  func.func @transform_2(%arg0: i32) -> (i32, i32) {
    %c0_i32 = arith.constant 0 : i32
    %c0_i32_0 = arith.constant 0 : i32
    %c0_i32_1 = arith.constant 0 : i32
    return %c0_i32, %c0_i32_0 : i32, i32
  }
  func.func @transform_3(%arg0: i32) -> (i32, i32) {
    %c0_i32 = arith.constant 0 : i32
    %c0_i32_0 = arith.constant 0 : i32
    %c0_i32_1 = arith.constant 0 : i32
    return %c0_i32, %c0_i32_0 : i32, i32
  }
  func.func @transform_4(%arg0: i32) -> (i32, i32, i32) {
    %c0_i32 = arith.constant 0 : i32
    %c0_i32_0 = arith.constant 0 : i32
    %c0_i32_1 = arith.constant 0 : i32
    %c0_i32_2 = arith.constant 0 : i32
    return %c0_i32, %c0_i32_0, %c0_i32_1 : i32, i32, i32
  }
  func.func @transform_5(%arg0: i32) -> (i32, i32, i32) {
    %c0_i32 = arith.constant 0 : i32
    %c0_i32_0 = arith.constant 0 : i32
    %c0_i32_1 = arith.constant 0 : i32
    %c0_i32_2 = arith.constant 0 : i32
    return %c0_i32, %c0_i32_0, %c0_i32_1 : i32, i32, i32
  }
  func.func @transform_6(%arg0: i32) -> (i32, i32) {
    %c0_i32 = arith.constant 0 : i32
    %c0_i32_0 = arith.constant 0 : i32
    %c0_i32_1 = arith.constant 0 : i32
    return %c0_i32, %c0_i32_0 : i32, i32
  }
  func.func @transform_7(%arg0: i32) -> (i32, i32) {
    %c0_i32 = arith.constant 0 : i32
    %c0_i32_0 = arith.constant 0 : i32
    %c0_i32_1 = arith.constant 0 : i32
    return %c0_i32, %c0_i32_0 : i32, i32
  }
  func.func @transform_8(%arg0: i32) -> (i32, i32) {
    %c0_i32 = arith.constant 0 : i32
    %c0_i32_0 = arith.constant 0 : i32
    %c0_i32_1 = arith.constant 0 : i32
    return %c0_i32, %c0_i32_0 : i32, i32
  }
  func.func @transform_9(%arg0: i32) -> (i32, i32) {
    %c0_i32 = arith.constant 0 : i32
    %c0_i32_0 = arith.constant 0 : i32
    %c0_i32_1 = arith.constant 0 : i32
    return %c0_i32, %c0_i32_0 : i32, i32
  }
  func.func @transform_10(%arg0: i32) -> (i32, i32, i32) {
    %c0_i32 = arith.constant 0 : i32
    %c0_i32_0 = arith.constant 0 : i32
    %c0_i32_1 = arith.constant 0 : i32
    return %arg0, %c0_i32, %c0_i32_0 : i32, i32, i32
  }
}

</mosaic_0001>

<llo_original>
// kernel: model_forward.1
$region0: #{model_forward.1}
  #allocation0 [shape = 'u32[]', space=smem, size = 0x4, offset = 0x4, fixed_abs, tag = 'smem constant byte address 0x4 - core index']
  #allocation1 [shape = 'u32[144,128]{1,0:T(1,128)}', space=vmem, size = 0x12000, scoped, tag = 'internal scratch']
  #allocation2 [shape = 'f32[16,64]{1,0:T(8,128)}', space=vmem, size = 0x2000, scoped, tag = 'scratch operand']
  %s0 = inlined_call_operand.vmem [shape: bf16[2,64,64], index: 0, kind: input, shape index: {}]
  %s1 = inlined_call_operand.vmem [shape: bf16[2,256,16], index: 1, kind: input, shape index: {}]
  %s2 = inlined_call_operand.vmem [shape: bf16[64,16], index: 2, kind: input, shape index: {}]
  %s3 = inlined_call_operand.vmem [shape: bf16[16,16], index: 3, kind: input, shape index: {}]
  %s4 = inlined_call_operand.vmem [shape: bf16[4,16,32], index: 4, kind: input, shape index: {}]
  %s5 = inlined_call_operand.vmem [shape: bf16[16,16,32], index: 5, kind: input, shape index: {}]
  %s6 = inlined_call_operand.vmem [shape: f32[6,16], index: 6, kind: input, shape index: {}]
  %s7 = inlined_call_operand.vmem [shape: f32[6,32], index: 7, kind: input, shape index: {}]
  %s8 = inlined_call_operand.vmem [shape: f32[64,3], index: 8, kind: input, shape index: {}]
  %s9 = inlined_call_operand.vmem [shape: f32[1,3], index: 9, kind: input, shape index: {}]
  %s10 = inlined_call_operand.vmem [shape: f32[2,16,3], index: 10, kind: output, shape index: {}]
  %s11 = sld [smem:[#allocation0]]
  $region73: #{model_forward.1} parent=0
    _
  %s13 = ssub.s32 1, %s11
  %s14 = scalar_select 0, %s13, %s11
  loop: start=0, step=1, limit=4
  $region2: #{model_forward.1} parent=0 // loop_pre_header
    _
  $region3: #{model_forward.1} parent=0 // loop_header
    %s16 = sphi 0, %s20
    %p17 = scmp.ge.s32.totalorder %s16, 4
    %s26 = sphi 0, %s28
    %s29 = sphi 0, %s26
    %s30 = sphi 0, %s29
    %s46 = sphi 0, %s30
    %s52 = sphi 0, %s54
    %s55 = sphi 0, %s52
    %s56 = sphi 0, %s55
    %s72 = sphi 0, %s56
    %s76 = sphi 0, %s76
    %s78 = sphi 0, %s76
    %s79 = sphi 0, %s78
    %s93 = sphi 0, %s79
    %s97 = sphi 0, %s97
    %s99 = sphi 0, %s97
    %s100 = sphi 0, %s99
    %s114 = sphi 0, %s100
    %s118 = sphi 0, %s118
    %s120 = sphi 0, %s118
    %s121 = sphi 0, %s120
    %s135 = sphi 0, %s121
    %s139 = sphi 0, %s139
    %s141 = sphi 0, %s139
    %s142 = sphi 0, %s141
    %s156 = sphi 0, %s142
    %s160 = sphi 0, %s160
    %s162 = sphi 0, %s160
    %s163 = sphi 0, %s162
    %s177 = sphi 0, %s163
    %s181 = sphi 0, %s181
    %s183 = sphi 0, %s181
    %s184 = sphi 0, %s183
    %s198 = sphi 0, %s184
    %s202 = sphi 0, %s202
    %s204 = sphi 0, %s202
    %s205 = sphi 0, %s204
    %s219 = sphi 0, %s205
    %s223 = sphi 0, %s223
    %s225 = sphi 0, %s223
    %s226 = sphi 0, %s225
    %s240 = sphi 0, %s226
    %s246 = sphi 0, %s248
    %s249 = sphi 0, %s246
    %s250 = sphi 0, %s249
    %s266 = sphi 0, %s250
  $region4: #{model_forward.1} parent=0 // loop_header_branch
    %19 = sbr.rel (%p17) target = $region8
  $region5: #{model_forward.1} parent=0 // loop_body
    %s21 = ssub.s32 %s16, 1
    %s22 = ssub.s32 %s16, 2
    %s23 = sadd.s32 %s16, 1
    %s24 = ssub.s32 %s16, %s23
    %p25 = scmp.eq.s32.totalorder %s24, 0
    %s27 = sadd.s32 %s26, 1
    %s28 = scalar_select %p25, %s26, %s27
    %p31 = pneg %p25
    %p32 = scmp.eq.s32.totalorder %s16, 1
    %p33 = por %p31, %p32
    %p34 = scmp.ne.s32.totalorder %s26, %s29
    %p35 = scmp.eq.s32.totalorder %s16, 0
    %p36 = por %p34, %p35
    %p37 = scmp.ne.s32.totalorder %s26, %s29
    %p38 = scmp.eq.s32.totalorder %s21, 1
    %p39 = por %p37, %p38
    %p40 = scmp.ne.s32.totalorder %s29, %s30
    %p41 = scmp.eq.s32.totalorder %s21, 0
    %p42 = por %p40, %p41
    %p43 = scmp.ne.s32.totalorder %s29, %s30
    %p44 = scmp.eq.s32.totalorder %s22, 1
    %p45 = por %p43, %p44
    %p47 = scmp.ne.s32.totalorder %s30, %s46
    %p48 = scmp.eq.s32.totalorder %s22, 0
    %p49 = por %p47, %p48
    %s50 = ssub.s32 %s16, %s23
    %p51 = scmp.eq.s32.totalorder %s50, 0
    %s53 = sadd.s32 %s52, 1
    %s54 = scalar_select %p51, %s52, %s53
    %p57 = pneg %p51
    %p58 = scmp.eq.s32.totalorder %s16, 1
    %p59 = por %p57, %p58
    %p60 = scmp.ne.s32.totalorder %s52, %s55
    %p61 = scmp.eq.s32.totalorder %s16, 0
    %p62 = por %p60, %p61
    %p63 = scmp.ne.s32.totalorder %s52, %s55
    %p64 = scmp.eq.s32.totalorder %s21, 1
    %p65 = por %p63, %p64
    %p66 = scmp.ne.s32.totalorder %s55, %s56
    %p67 = scmp.eq.s32.totalorder %s21, 0
    %p68 = por %p66, %p67
    %p69 = scmp.ne.s32.totalorder %s55, %s56
    %p70 = scmp.eq.s32.totalorder %s22, 1
    %p71 = por %p69, %p70
    %p73 = scmp.ne.s32.totalorder %s56, %s72
    %p74 = scmp.eq.s32.totalorder %s22, 0
    %p75 = por %p73, %p74
    %s77 = sadd.s32 %s76, 1
    %p80 = scmp.eq.s32.totalorder %s16, 1
    %p81 = scmp.ne.s32.totalorder %s76, %s78
    %p82 = scmp.eq.s32.totalorder %s16, 0
    %p83 = por %p81, %p82
    %p84 = scmp.ne.s32.totalorder %s76, %s78
    %p85 = scmp.eq.s32.totalorder %s21, 1
    %p86 = por %p84, %p85
    %p87 = scmp.ne.s32.totalorder %s78, %s79
    %p88 = scmp.eq.s32.totalorder %s21, 0
    %p89 = por %p87, %p88
    %p90 = scmp.ne.s32.totalorder %s78, %s79
    %p91 = scmp.eq.s32.totalorder %s22, 1
    %p92 = por %p90, %p91
    %p94 = scmp.ne.s32.totalorder %s79, %s93
    %p95 = scmp.eq.s32.totalorder %s22, 0
    %p96 = por %p94, %p95
    %s98 = sadd.s32 %s97, 1
    %p101 = scmp.eq.s32.totalorder %s16, 1
    %p102 = scmp.ne.s32.totalorder %s97, %s99
    %p103 = scmp.eq.s32.totalorder %s16, 0
    %p104 = por %p102, %p103
    %p105 = scmp.ne.s32.totalorder %s97, %s99
    %p106 = scmp.eq.s32.totalorder %s21, 1
    %p107 = por %p105, %p106
    %p108 = scmp.ne.s32.totalorder %s99, %s100
    %p109 = scmp.eq.s32.totalorder %s21, 0
    %p110 = por %p108, %p109
    %p111 = scmp.ne.s32.totalorder %s99, %s100
    %p112 = scmp.eq.s32.totalorder %s22, 1
    %p113 = por %p111, %p112
    %p115 = scmp.ne.s32.totalorder %s100, %s114
    %p116 = scmp.eq.s32.totalorder %s22, 0
    %p117 = por %p115, %p116
    %s119 = sadd.s32 %s118, 1
    %p122 = scmp.eq.s32.totalorder %s16, 1
    %p123 = scmp.ne.s32.totalorder %s118, %s120
    %p124 = scmp.eq.s32.totalorder %s16, 0
    %p125 = por %p123, %p124
    %p126 = scmp.ne.s32.totalorder %s118, %s120
    %p127 = scmp.eq.s32.totalorder %s21, 1
    %p128 = por %p126, %p127
    %p129 = scmp.ne.s32.totalorder %s120, %s121
    %p130 = scmp.eq.s32.totalorder %s21, 0
    %p131 = por %p129, %p130
    %p132 = scmp.ne.s32.totalorder %s120, %s121
    %p133 = scmp.eq.s32.totalorder %s22, 1
    %p134 = por %p132, %p133
    %p136 = scmp.ne.s32.totalorder %s121, %s135
    %p137 = scmp.eq.s32.totalorder %s22, 0
    %p138 = por %p136, %p137
    %s140 = sadd.s32 %s139, 1
    %p143 = scmp.eq.s32.totalorder %s16, 1
    %p144 = scmp.ne.s32.totalorder %s139, %s141
    %p145 = scmp.eq.s32.totalorder %s16, 0
    %p146 = por %p144, %p145
    %p147 = scmp.ne.s32.totalorder %s139, %s141
    %p148 = scmp.eq.s32.totalorder %s21, 1
    %p149 = por %p147, %p148
    %p150 = scmp.ne.s32.totalorder %s141, %s142
    %p151 = scmp.eq.s32.totalorder %s21, 0
    %p152 = por %p150, %p151
    %p153 = scmp.ne.s32.totalorder %s141, %s142
    %p154 = scmp.eq.s32.totalorder %s22, 1
    %p155 = por %p153, %p154
    %p157 = scmp.ne.s32.totalorder %s142, %s156
    %p158 = scmp.eq.s32.totalorder %s22, 0
    %p159 = por %p157, %p158
    %s161 = sadd.s32 %s160, 1
    %p164 = scmp.eq.s32.totalorder %s16, 1
    %p165 = scmp.ne.s32.totalorder %s160, %s162
    %p166 = scmp.eq.s32.totalorder %s16, 0
    %p167 = por %p165, %p166
    %p168 = scmp.ne.s32.totalorder %s160, %s162
    %p169 = scmp.eq.s32.totalorder %s21, 1
    %p170 = por %p168, %p169
    %p171 = scmp.ne.s32.totalorder %s162, %s163
    %p172 = scmp.eq.s32.totalorder %s21, 0
    %p173 = por %p171, %p172
    %p174 = scmp.ne.s32.totalorder %s162, %s163
    %p175 = scmp.eq.s32.totalorder %s22, 1
    %p176 = por %p174, %p175
    %p178 = scmp.ne.s32.totalorder %s163, %s177
    %p179 = scmp.eq.s32.totalorder %s22, 0
    %p180 = por %p178, %p179
    %s182 = sadd.s32 %s181, 1
    %p185 = scmp.eq.s32.totalorder %s16, 1
    %p186 = scmp.ne.s32.totalorder %s181, %s183
    %p187 = scmp.eq.s32.totalorder %s16, 0
    %p188 = por %p186, %p187
    %p189 = scmp.ne.s32.totalorder %s181, %s183
    %p190 = scmp.eq.s32.totalorder %s21, 1
    %p191 = por %p189, %p190
    %p192 = scmp.ne.s32.totalorder %s183, %s184
    %p193 = scmp.eq.s32.totalorder %s21, 0
    %p194 = por %p192, %p193
    %p195 = scmp.ne.s32.totalorder %s183, %s184
    %p196 = scmp.eq.s32.totalorder %s22, 1
    %p197 = por %p195, %p196
    %p199 = scmp.ne.s32.totalorder %s184, %s198
    %p200 = scmp.eq.s32.totalorder %s22, 0
    %p201 = por %p199, %p200
    %s203 = sadd.s32 %s202, 1
    %p206 = scmp.eq.s32.totalorder %s16, 1
    %p207 = scmp.ne.s32.totalorder %s202, %s204
    %p208 = scmp.eq.s32.totalorder %s16, 0
    %p209 = por %p207, %p208
    %p210 = scmp.ne.s32.totalorder %s202, %s204
    %p211 = scmp.eq.s32.totalorder %s21, 1
    %p212 = por %p210, %p211
    %p213 = scmp.ne.s32.totalorder %s204, %s205
    %p214 = scmp.eq.s32.totalorder %s21, 0
    %p215 = por %p213, %p214
    %p216 = scmp.ne.s32.totalorder %s204, %s205
    %p217 = scmp.eq.s32.totalorder %s22, 1
    %p218 = por %p216, %p217
    %p220 = scmp.ne.s32.totalorder %s205, %s219
    %p221 = scmp.eq.s32.totalorder %s22, 0
    %p222 = por %p220, %p221
    %s224 = sadd.s32 %s223, 1
    %p227 = scmp.eq.s32.totalorder %s16, 1
    %p228 = scmp.ne.s32.totalorder %s223, %s225
    %p229 = scmp.eq.s32.totalorder %s16, 0
    %p230 = por %p228, %p229
    %p231 = scmp.ne.s32.totalorder %s223, %s225
    %p232 = scmp.eq.s32.totalorder %s21, 1
    %p233 = por %p231, %p232
    %p234 = scmp.ne.s32.totalorder %s225, %s226
    %p235 = scmp.eq.s32.totalorder %s21, 0
    %p236 = por %p234, %p235
    %p237 = scmp.ne.s32.totalorder %s225, %s226
    %p238 = scmp.eq.s32.totalorder %s22, 1
    %p239 = por %p237, %p238
    %p241 = scmp.ne.s32.totalorder %s226, %s240
    %p242 = scmp.eq.s32.totalorder %s22, 0
    %p243 = por %p241, %p242
    %s244 = ssub.s32 %s16, %s23
    %p245 = scmp.eq.s32.totalorder %s244, 0
    %s247 = sadd.s32 %s246, 1
    %s248 = scalar_select %p245, %s246, %s247
    %p251 = pneg %p245
    %p252 = scmp.eq.s32.totalorder %s16, 1
    %p253 = por %p251, %p252
    %p254 = scmp.ne.s32.totalorder %s246, %s249
    %p255 = scmp.eq.s32.totalorder %s16, 0
    %p256 = por %p254, %p255
    %p257 = scmp.ne.s32.totalorder %s246, %s249
    %p258 = scmp.eq.s32.totalorder %s21, 1
    %p259 = por %p257, %p258
    %p260 = scmp.ne.s32.totalorder %s249, %s250
    %p261 = scmp.eq.s32.totalorder %s21, 0
    %p262 = por %p260, %p261
    %p263 = scmp.ne.s32.totalorder %s249, %s250
    %p264 = scmp.eq.s32.totalorder %s22, 1
    %p265 = por %p263, %p264
    %p267 = scmp.ne.s32.totalorder %s250, %s266
    %p268 = scmp.eq.s32.totalorder %s22, 0
    %p269 = por %p267, %p268
    %p270 = scmp.le.s32.totalorder 1, %s16
    %p271 = scmp.lt.s32.totalorder %s16, 3
    %p272 = pnand %p270, %p271
    %p273 = pneg %p272
    // Predicated region
    $region9: #{model_forward.1} parent=5 // pred_check
      _
    $region10: #{model_forward.1} parent=5 // pred_check_branch
      %275 = sbr.rel (%p272) target = $region12
    $region11: #{model_forward.1} parent=5 // pred_region
      %s276 = ssub.s32 %s16, 1
      // Predicated region
      $region13: #{model_forward.1} parent=11 // pred_check
        %p277 = pneg %p89
      $region14: #{model_forward.1} parent=11 // pred_check_branch
        %279 = sbr.rel (%p277) target = $region16
      $region15: #{model_forward.1} parent=11 // pred_region
        _
      $region16: #{model_forward.1} parent=11 // pred_fallthru
        _
      // Predicated region
      $region17: #{model_forward.1} parent=11 // pred_check
        %p280 = pneg %p110
      $region18: #{model_forward.1} parent=11 // pred_check_branch
        %282 = sbr.rel (%p280) target = $region20
      $region19: #{model_forward.1} parent=11 // pred_region
        _
      $region20: #{model_forward.1} parent=11 // pred_fallthru
        _
      // Predicated region
      $region21: #{model_forward.1} parent=11 // pred_check
        %p283 = pneg %p131
      $region22: #{model_forward.1} parent=11 // pred_check_branch
        %285 = sbr.rel (%p283) target = $region24
      $region23: #{model_forward.1} parent=11 // pred_region
        _
      $region24: #{model_forward.1} parent=11 // pred_fallthru
        _
      // Predicated region
      $region25: #{model_forward.1} parent=11 // pred_check
        %p286 = pneg %p152
      $region26: #{model_forward.1} parent=11 // pred_check_branch
        %288 = sbr.rel (%p286) target = $region28
      $region27: #{model_forward.1} parent=11 // pred_region
        _
      $region28: #{model_forward.1} parent=11 // pred_fallthru
        _
      // Predicated region
      $region29: #{model_forward.1} parent=11 // pred_check
        %p289 = pneg %p173
      $region30: #{model_forward.1} parent=11 // pred_check_branch
        %291 = sbr.rel (%p289) target = $region32
      $region31: #{model_forward.1} parent=11 // pred_region
        _
      $region32: #{model_forward.1} parent=11 // pred_fallthru
        _
      // Predicated region
      $region33: #{model_forward.1} parent=11 // pred_check
        %p292 = pneg %p194
      $region34: #{model_forward.1} parent=11 // pred_check_branch
        %294 = sbr.rel (%p292) target = $region36
      $region35: #{model_forward.1} parent=11 // pred_region
        _
      $region36: #{model_forward.1} parent=11 // pred_fallthru
        _
      // Predicated region
      $region37: #{model_forward.1} parent=11 // pred_check
        %p295 = pneg %p215
      $region38: #{model_forward.1} parent=11 // pred_check_branch
        %297 = sbr.rel (%p295) target = $region40
      $region39: #{model_forward.1} parent=11 // pred_region
        _
      $region40: #{model_forward.1} parent=11 // pred_fallthru
        _
      // Predicated region
      $region41: #{model_forward.1} parent=11 // pred_check
        %p298 = pneg %p236
      $region42: #{model_forward.1} parent=11 // pred_check_branch
        %300 = sbr.rel (%p298) target = $region44
      $region43: #{model_forward.1} parent=11 // pred_region
        _
      $region44: #{model_forward.1} parent=11 // pred_fallthru
        _
    $region12: #{model_forward.1} parent=5 // pred_fallthru
      _
    %p301 = scmp.lt.s32.totalorder %s16, 2
    // Predicated region
    $region45: #{model_forward.1} parent=5 // pred_check
      %p302 = pneg %p301
    $region46: #{model_forward.1} parent=5 // pred_check_branch
      %304 = sbr.rel (%p302) target = $region48
    $region47: #{model_forward.1} parent=5 // pred_region
      // Predicated region
      $region49: #{model_forward.1} parent=47 // pred_check
        %p305 = pneg %p36
      $region50: #{model_forward.1} parent=47 // pred_check_branch
        %307 = sbr.rel (%p305) target = $region52
      $region51: #{model_forward.1} parent=47 // pred_region
        %p308 = scmp.lt.s32.totalorder %s16, 1
        %s309 = scalar_select %p308, %s16, 1
        %s310 = smul.addr %s309, 8
        %s311 = smul.addr %s310, 4
        %s312 = scalar_lea.vmem %s0, %s311
      $region52: #{model_forward.1} parent=47 // pred_fallthru
        _
      // Predicated region
      $region53: #{model_forward.1} parent=47 // pred_check
        %p313 = pneg %p62
      $region54: #{model_forward.1} parent=47 // pred_check_branch
        %315 = sbr.rel (%p313) target = $region56
      $region55: #{model_forward.1} parent=47 // pred_region
        %p316 = scmp.lt.s32.totalorder %s16, 1
        %s317 = scalar_select %p316, %s16, 1
        %s318 = smul.addr %s317, 32
        %s319 = smul.addr %s318, 4
        %s320 = scalar_lea.vmem %s1, %s319
      $region56: #{model_forward.1} parent=47 // pred_fallthru
        _
    $region48: #{model_forward.1} parent=5 // pred_fallthru
      _
    %p321 = scmp.le.s32.totalorder 1, %s16
    %p322 = scmp.lt.s32.totalorder %s16, 3
    %p323 = pnand %p321, %p322
    %p324 = pneg %p323
    // Predicated region
    $region57: #{model_forward.1} parent=5 // pred_check
      _
    $region58: #{model_forward.1} parent=5 // pred_check_branch
      %326 = sbr.rel (%p323) target = $region60
    $region59: #{model_forward.1} parent=5 // pred_region
      %s327 = ssub.s32 %s16, 1
      %p328 = scmp.lt.s32.totalorder %s21, 1
      %s329 = scalar_select %p328, %s21, 1
      %s330 = smul.addr %s329, 8
      %s331 = smul.addr %s330, 4
      %s332 = scalar_lea.vmem %s0, %s331
      %p333 = pneg %p42
      %p334 = pneg %p39
      %p335 = scmp.lt.s32.totalorder %s21, 1
      %s336 = scalar_select %p335, %s21, 1
      %s337 = smul.addr %s336, 32
      %s338 = smul.addr %s337, 4
      %s339 = scalar_lea.vmem %s1, %s338
      %p340 = pneg %p68
      %p341 = pneg %p65
      %p342 = pneg %p89
      %p343 = pneg %p86
      %p344 = pneg %p110
      %p345 = pneg %p107
      %p346 = pneg %p131
      %p347 = pneg %p128
      %p348 = pneg %p152
      %p349 = pneg %p149
      %p350 = pneg %p173
      %p351 = pneg %p170
      %p352 = pneg %p194
      %p353 = pneg %p191
      %p354 = pneg %p215
      %p355 = pneg %p212
      %p356 = pneg %p236
      %p357 = pneg %p233
      %p358 = pneg %p262
      %p359 = pneg %p259
      %p360 = scmp.lt.s32.totalorder %s21, 1
      %s361 = scalar_select %p360, %s21, 1
      %s362 = smul.addr %s361, 2
      %s363 = smul.addr %s362, 8
      %s364 = scalar_lea.vmem %s10, %s363
      %p365 = scmp.lt.s32.totalorder %s21, 1
      %s366 = scalar_select %p365, %s21, 1
      %s367 = smul.addr %s366, 8
      %s368 = smul.addr %s367, 4
      %s369 = scalar_lea.vmem %s0, %s368
      %p370 = scmp.lt.s32.totalorder %s21, 1
      %s371 = scalar_select %p370, %s21, 1
      %s372 = smul.addr %s371, 32
      %s373 = smul.addr %s372, 4
      %s374 = scalar_lea.vmem %s1, %s373
      %p375 = scmp.lt.s32.totalorder %s21, 1
      %s376 = scalar_select %p375, %s21, 1
      %s377 = smul.addr %s376, 2
      %s378 = smul.addr %s377, 8
      %s379 = scalar_lea.vmem %s10, %s378
      %v381 = vld [vmem:[%s6] sm:$0x3f]
      %v382 = vld [vmem:[%s7] sm:$0x3f]
      %v383 = vld [vmem:[%s369] sm:$0xf]
      %v384 = vld [vmem:[%s369 + $0x4] sm:$0xf]
      %v385 = vld [vmem:[%s369 + $0x8] sm:$0xf]
      %v386 = vld [vmem:[%s369 + $0xc] sm:$0xf]
      %v387 = vld [vmem:[%s369 + $0x10] sm:$0xf]
      %v388 = vld [vmem:[%s369 + $0x14] sm:$0xf]
      %v389 = vld [vmem:[%s369 + $0x18] sm:$0xf]
      %v390 = vld [vmem:[%s369 + $0x1c] sm:$0xf]
      %v391 = vld [vmem:[%s2] sm:$0xf]
      %v392 = vld [vmem:[%s2 + $0x4] sm:$0xf]
      %v393 = vld [vmem:[%s2 + $0x8] sm:$0xf]
      %v394 = vld [vmem:[%s2 + $0xc] sm:$0xf]
      %v395 = vld [vmem:[%s2 + $0x10] sm:$0xf]
      %v396 = vld [vmem:[%s2 + $0x14] sm:$0xf]
      %v397 = vld [vmem:[%s2 + $0x18] sm:$0xf]
      %v398 = vld [vmem:[%s2 + $0x1c] sm:$0xf]
      %v399 = vlaneseq
      %v400 = vshrl.u32 %v399, 7
      %v401 = vsub.s32 0, %v400
      %v402 = vrot.slane %v381, %v401
      %v411 = vunpack.c.l.b16 %v383
      %v412 = vunpack.c.l.b16 %v384
      %v413 = vunpack.c.l.b16 %v385
      %v414 = vunpack.c.l.b16 %v386
      %v415 = vunpack.c.l.b16 %v387
      %v416 = vunpack.c.l.b16 %v388
      %v417 = vunpack.c.l.b16 %v389
      %v418 = vunpack.c.l.b16 %v390
      %v419 = vpack.c.b16 %v412, %v411
      %v420 = vpack.c.b16 %v414, %v413
      %v421 = vpack.c.b16 %v416, %v415
      %v422 = vpack.c.b16 %v418, %v417
      %v431 = vunpack.c.l.b16 %v391
      %v432 = vunpack.c.l.b16 %v392
      %v433 = vunpack.c.l.b16 %v393
      %v434 = vunpack.c.l.b16 %v394
      %v435 = vunpack.c.l.b16 %v395
      %v436 = vunpack.c.l.b16 %v396
      %v437 = vunpack.c.l.b16 %v397
      %v438 = vunpack.c.l.b16 %v398
      %v439 = vpack.c.b16 %v432, %v431
      %v440 = vpack.c.b16 %v434, %v433
      %v441 = vpack.c.b16 %v436, %v435
      %v442 = vpack.c.b16 %v438, %v437
      %vm447 = vcmask 523264
      %v449 = vsel %vm447, %v419, 0
      %v452 = vsel %vm447, %v420, 0
      %v455 = vsel %vm447, %v421, 0
      %v458 = vsel %vm447, %v422, 0
      %460 = vmatprep.subr.bf16.mxu0 0
      %461 = vmatpush1.bf16.msra.mxu0 %v439
      %462 = vmatprep.subr.bf16.mxu0 0
      %463 = vmatpush1.bf16.msra.mxu0 %v440
      %464 = vmatprep.subr.bf16.mxu0 0
      %465 = vmatpush1.bf16.msra.mxu0 %v441
      %466 = vmatprep.subr.bf16.mxu0 0
      %467 = vmatpush1.bf16.msra.mxu0 %v442
      %468 = vmatprep.subr.bf16.mxu0 0
      %469 = vmatpush1.bf16.msra.mxu0 0
      %470 = vmatprep.subr.bf16.mxu0 0
      %471 = vmatpush1.bf16.msra.mxu0 0
      %472 = vmatprep.subr.bf16.mxu0 0
      %473 = vmatpush1.bf16.msra.mxu0 0
      %474 = vmatprep.subr.bf16.mxu0 0
      %475 = vmatpush1.bf16.msra.mxu0 0
      %476 = vmatprep.subr.bf16.mxu0 0
      %477 = vmatpush1.bf16.msra.mxu0 0
      %478 = vmatprep.subr.bf16.mxu0 0
      %479 = vmatpush1.bf16.msra.mxu0 0
      %480 = vmatprep.subr.bf16.mxu0 0
      %481 = vmatpush1.bf16.msra.mxu0 0
      %482 = vmatprep.subr.bf16.mxu0 0
      %483 = vmatpush1.bf16.msra.mxu0 0
      %484 = vmatprep.subr.bf16.mxu0 0
      %485 = vmatpush1.bf16.msra.mxu0 0
      %486 = vmatprep.subr.bf16.mxu0 0
      %487 = vmatpush1.bf16.msra.mxu0 0
      %488 = vmatprep.subr.bf16.mxu0 0
      %489 = vmatpush1.bf16.msra.mxu0 0
      %490 = vmatprep.subr.bf16.mxu0 0
      %491 = vmatpush1.bf16.msra.mxu0 0
      %492 = vmatprep.mubr.bf16.mxu0 0
      %493 = vmatmul.mubr.bf16.gmra.mrb[0].mxu0 %v449
      %v494 = vpop.f32.mrb[0].mxu0
      %v495 = vadd.f32 %v402, %v494
      %v496 = vpop.f32.mrb[0].mxu0
      %v497 = vpop.f32.mrb[0].mxu0
      %v498 = vadd.f32 %v402, %v497
      %v499 = vpop.f32.mrb[0].mxu0
      %500 = vmatprep.mubr.bf16.mxu0 0
      %501 = vmatmul.mubr.bf16.gmra.mrb[0].mxu0 %v452
      %v502 = vpop.f32.mrb[0].mxu0
      %v503 = vadd.f32 %v402, %v502
      %v504 = vpop.f32.mrb[0].mxu0
      %v505 = vpop.f32.mrb[0].mxu0
      %v506 = vadd.f32 %v402, %v505
      %v507 = vpop.f32.mrb[0].mxu0
      %508 = vmatprep.mubr.bf16.mxu0 0
      %509 = vmatmul.mubr.bf16.gmra.mrb[0].mxu0 %v455
      %v510 = vpop.f32.mrb[0].mxu0
      %v511 = vadd.f32 %v402, %v510
      %v512 = vpop.f32.mrb[0].mxu0
      %v513 = vpop.f32.mrb[0].mxu0
      %v514 = vadd.f32 %v402, %v513
      %v515 = vpop.f32.mrb[0].mxu0
      %516 = vmatprep.mubr.bf16.mxu0 0
      %517 = vmatmul.mubr.bf16.gmra.mrb[0].mxu0 %v458
      %v518 = vpop.f32.mrb[0].mxu0
      %v519 = vadd.f32 %v402, %v518
      %v520 = vpop.f32.mrb[0].mxu0
      %v521 = vpop.f32.mrb[0].mxu0
      %v522 = vadd.f32 %v402, %v521
      %v523 = vpop.f32.mrb[0].mxu0
      %524 = vdwg.mxu0
      %vm525 = vcmask 130048
      %v526 = vsel %vm525, %v495, 0.0
      %v527 = vsel %vm525, %v503, 0.0
      %v528 = vadd.f32 %v526, %v527
      %v529 = vsel %vm525, %v511, 0.0
      %v530 = vadd.f32 %v528, %v529
      %v531 = vsel %vm525, %v519, 0.0
      %v532 = vadd.f32 %v530, %v531
      %v533 = vsel %vm525, %v498, 0.0
      %v534 = vsel %vm525, %v506, 0.0
      %v535 = vadd.f32 %v533, %v534
      %v536 = vsel %vm525, %v514, 0.0
      %v537 = vadd.f32 %v535, %v536
      %v538 = vsel %vm525, %v522, 0.0
      %v539 = vadd.f32 %v537, %v538
      %v540 = vsel %vm525, %v532, 0.0
      %v541 = vrot.slane %v540, 4
      %v542 = vadd.f32 %v540, %v541
      %v543 = vrot.slane %v542, 2
      %v544 = vadd.f32 %v542, %v543
      %v545 = vrot.slane %v544, 1
      %v546 = vadd.f32 %v544, %v545
      %v547 = vsel %vm525, %v539, 0.0
      %v548 = vrot.slane %v547, 4
      %v549 = vadd.f32 %v547, %v548
      %v550 = vrot.slane %v549, 2
      %v551 = vadd.f32 %v549, %v550
      %v552 = vrot.slane %v551, 1
      %v553 = vadd.f32 %v551, %v552
      %v554 = vmul.f32 %v546, 0.03125
      %v555 = vmul.f32 %v553, 0.03125
      %v556 = vmul.f32 %v495, %v495
      %v557 = vmul.f32 %v498, %v498
      %v558 = vmul.f32 %v503, %v503
      %v559 = vmul.f32 %v506, %v506
      %v560 = vmul.f32 %v511, %v511
      %v561 = vmul.f32 %v514, %v514
      %v562 = vmul.f32 %v519, %v519
      %v563 = vmul.f32 %v522, %v522
      %v564 = vsel %vm525, %v556, 0.0
      %v565 = vsel %vm525, %v558, 0.0
      %v566 = vadd.f32 %v564, %v565
      %v567 = vsel %vm525, %v560, 0.0
      %v568 = vadd.f32 %v566, %v567
      %v569 = vsel %vm525, %v562, 0.0
      %v570 = vadd.f32 %v568, %v569
      %v571 = vsel %vm525, %v557, 0.0
      %v572 = vsel %vm525, %v559, 0.0
      %v573 = vadd.f32 %v571, %v572
      %v574 = vsel %vm525, %v561, 0.0
      %v575 = vadd.f32 %v573, %v574
      %v576 = vsel %vm525, %v563, 0.0
      %v577 = vadd.f32 %v575, %v576
      %v578 = vsel %vm525, %v570, 0.0
      %v579 = vrot.slane %v578, 4
      %v580 = vadd.f32 %v578, %v579
      %v581 = vrot.slane %v580, 2
      %v582 = vadd.f32 %v580, %v581
      %v583 = vrot.slane %v582, 1
      %v584 = vadd.f32 %v582, %v583
      %v585 = vsel %vm525, %v577, 0.0
      %v586 = vrot.slane %v585, 4
      %v587 = vadd.f32 %v585, %v586
      %v588 = vrot.slane %v587, 2
      %v589 = vadd.f32 %v587, %v588
      %v590 = vrot.slane %v589, 1
      %v591 = vadd.f32 %v589, %v590
      %v592 = vmul.f32 %v584, 0.03125
      %v593 = vmul.f32 %v591, 0.03125
      %v594 = vmul.f32 %v554, %v554
      %v595 = vmul.f32 %v555, %v555
      %v596 = vsub.f32 %v592, %v594
      %v597 = vsub.f32 %v593, %v595
      %v598 = vmax.f32 %v596, 0.0
      %v599 = vmax.f32 %v597, 0.0
      %v600 = vadd.f32 %v598, 1e-05
      %v601 = vadd.f32 %v599, 1e-05
      %v602 = vrsqrt.pop %v600
      %v603 = vrsqrt.pop %v601
      %v604 = vmul.f32 %v381, %v602
      %v605 = vmul.f32 %v381, %v603
      %v606 = vmul.f32 %v554, %v604
      %v607 = vmul.f32 %v555, %v605
      %v610 = vrot.slane %v606, 7
      %v611 = vrot.slane %v607, 7
      %v614 = vsub.f32 %v381, %v610
      %v615 = vsub.f32 %v381, %v611
      %v616 = vlaneseq
      %v617 = vshrl.u32 %v616, 7
      %v618 = vsub.s32 1, %v617
      %v619 = vrot.slane %v604, %v618
      %v620 = vlaneseq
      %v621 = vshrl.u32 %v620, 7
      %v622 = vsub.s32 1, %v621
      %v623 = vrot.slane %v605, %v622
      %v624 = vmul.f32 %v495, %v619
      %v625 = vmul.f32 %v498, %v623
      %v626 = vmul.f32 %v503, %v619
      %v627 = vmul.f32 %v506, %v623
      %v628 = vmul.f32 %v511, %v619
      %v629 = vmul.f32 %v514, %v623
      %v630 = vmul.f32 %v519, %v619
      %v631 = vmul.f32 %v522, %v623
      %v632 = vlaneseq
      %v633 = vshrl.u32 %v632, 7
      %v634 = vsub.s32 2, %v633
      %v635 = vrot.slane %v614, %v634
      %v636 = vlaneseq
      %v637 = vshrl.u32 %v636, 7
      %v638 = vsub.s32 2, %v637
      %v639 = vrot.slane %v615, %v638
      %v640 = vadd.f32 %v624, %v635
      %v641 = vadd.f32 %v625, %v639
      %v642 = vadd.f32 %v626, %v635
      %v643 = vadd.f32 %v627, %v639
      %v644 = vadd.f32 %v628, %v635
      %v645 = vadd.f32 %v629, %v639
      %v646 = vadd.f32 %v630, %v635
      %v647 = vadd.f32 %v631, %v639
      %v648 = vmax.f32 %v640, 0.0
      %v649 = vmax.f32 %v641, 0.0
      %v650 = vmax.f32 %v642, 0.0
      %v651 = vmax.f32 %v643, 0.0
      %v652 = vmax.f32 %v644, 0.0
      %v653 = vmax.f32 %v645, 0.0
      %v654 = vmax.f32 %v646, 0.0
      %v655 = vmax.f32 %v647, 0.0
      %v656 = vpack.c.bf16 %v649, %v648
      %v657 = vpack.c.bf16 %v651, %v650
      %v658 = vpack.c.bf16 %v653, %v652
      %v659 = vpack.c.bf16 %v655, %v654
      %v660 = vld [vmem:[%s4] sm:$0xf]
      %v661 = vld [vmem:[%s4 + $0x4] sm:$0xf]
      %v662 = vld [vmem:[%s4 + $0x8] sm:$0xf]
      %v663 = vld [vmem:[%s4 + $0xc] sm:$0xf]
      %v664 = vld [vmem:[%s4 + $0x10] sm:$0xf]
      %v665 = vld [vmem:[%s4 + $0x14] sm:$0xf]
      %v666 = vld [vmem:[%s4 + $0x18] sm:$0xf]
      %v667 = vld [vmem:[%s4 + $0x1c] sm:$0xf]
      %v670 = vunpack.c.l.b16 %v660
      %v671 = vunpack.c.l.b16 %v661
      %v672 = vpack.c.b16 %v671, %v670
      %v675 = vsel %vm525, %v656, 0
      %677 = vmatprep.subr.bf16.mxu0 0
      %678 = vmatpush1.bf16.msra.mxu0 %v672
      %679 = vmatprep.subr.bf16.mxu0 0
      %680 = vmatpush1.bf16.msra.mxu0 0
      %681 = vmatprep.subr.bf16.mxu0 0
      %682 = vmatpush1.bf16.msra.mxu0 0
      %683 = vmatprep.subr.bf16.mxu0 0
      %684 = vmatpush1.bf16.msra.mxu0 0
      %685 = vmatprep.subr.bf16.mxu0 0
      %686 = vmatpush1.bf16.msra.mxu0 0
      %687 = vmatprep.subr.bf16.mxu0 0
      %688 = vmatpush1.bf16.msra.mxu0 0
      %689 = vmatprep.subr.bf16.mxu0 0
      %690 = vmatpush1.bf16.msra.mxu0 0
      %691 = vmatprep.subr.bf16.mxu0 0
      %692 = vmatpush1.bf16.msra.mxu0 0
      %693 = vmatprep.subr.bf16.mxu0 0
      %694 = vmatpush1.bf16.msra.mxu0 0
      %695 = vmatprep.subr.bf16.mxu0 0
      %696 = vmatpush1.bf16.msra.mxu0 0
      %697 = vmatprep.subr.bf16.mxu0 0
      %698 = vmatpush1.bf16.msra.mxu0 0
      %699 = vmatprep.subr.bf16.mxu0 0
      %700 = vmatpush1.bf16.msra.mxu0 0
      %701 = vmatprep.subr.bf16.mxu0 0
      %702 = vmatpush1.bf16.msra.mxu0 0
      %703 = vmatprep.subr.bf16.mxu0 0
      %704 = vmatpush1.bf16.msra.mxu0 0
      %705 = vmatprep.subr.bf16.mxu0 0
      %706 = vmatpush1.bf16.msra.mxu0 0
      %707 = vmatprep.subr.bf16.mxu0 0
      %708 = vmatpush1.bf16.msra.mxu0 0
      %709 = vmatprep.mubr.bf16.mxu0 0
      %710 = vmatmul.mubr.bf16.gmra.mrb[0].mxu0 %v675
      %v711 = vpop.f32.mrb[0].mxu0
      %v712 = vadd.f32 0.0, %v711
      %v713 = vpop.f32.mrb[0].mxu0
      %v714 = vpop.f32.mrb[0].mxu0
      %v715 = vadd.f32 0.0, %v714
      %v716 = vpop.f32.mrb[0].mxu0
      %717 = vdwg.mxu0
      %v720 = vunpack.c.l.b16 %v662
      %v721 = vunpack.c.l.b16 %v663
      %v722 = vpack.c.b16 %v721, %v720
      %v725 = vsel %vm525, %v657, 0
      %727 = vmatprep.subr.bf16.mxu0 0
      %728 = vmatpush1.bf16.msra.mxu0 %v722
      %729 = vmatprep.subr.bf16.mxu0 0
      %730 = vmatpush1.bf16.msra.mxu0 0
      %731 = vmatprep.subr.bf16.mxu0 0
      %732 = vmatpush1.bf16.msra.mxu0 0
      %733 = vmatprep.subr.bf16.mxu0 0
      %734 = vmatpush1.bf16.msra.mxu0 0
      %735 = vmatprep.subr.bf16.mxu0 0
      %736 = vmatpush1.bf16.msra.mxu0 0
      %737 = vmatprep.subr.bf16.mxu0 0
      %738 = vmatpush1.bf16.msra.mxu0 0
      %739 = vmatprep.subr.bf16.mxu0 0
      %740 = vmatpush1.bf16.msra.mxu0 0
      %741 = vmatprep.subr.bf16.mxu0 0
      %742 = vmatpush1.bf16.msra.mxu0 0
      %743 = vmatprep.subr.bf16.mxu0 0
      %744 = vmatpush1.bf16.msra.mxu0 0
      %745 = vmatprep.subr.bf16.mxu0 0
      %746 = vmatpush1.bf16.msra.mxu0 0
      %747 = vmatprep.subr.bf16.mxu0 0
      %748 = vmatpush1.bf16.msra.mxu0 0
      %749 = vmatprep.subr.bf16.mxu0 0
      %750 = vmatpush1.bf16.msra.mxu0 0
      %751 = vmatprep.subr.bf16.mxu0 0
      %752 = vmatpush1.bf16.msra.mxu0 0
      %753 = vmatprep.subr.bf16.mxu0 0
      %754 = vmatpush1.bf16.msra.mxu0 0
      %755 = vmatprep.subr.bf16.mxu0 0
      %756 = vmatpush1.bf16.msra.mxu0 0
      %757 = vmatprep.subr.bf16.mxu0 0
      %758 = vmatpush1.bf16.msra.mxu0 0
      %759 = vmatprep.mubr.bf16.mxu0 0
      %760 = vmatmul.mubr.bf16.gmra.mrb[0].mxu0 %v725
      %v761 = vpop.f32.mrb[0].mxu0
      %v762 = vadd.f32 0.0, %v761
      %v763 = vpop.f32.mrb[0].mxu0
      %v764 = vpop.f32.mrb[0].mxu0
      %v765 = vadd.f32 0.0, %v764
      %v766 = vpop.f32.mrb[0].mxu0
      %767 = vdwg.mxu0
      %v770 = vunpack.c.l.b16 %v664
      %v771 = vunpack.c.l.b16 %v665
      %v772 = vpack.c.b16 %v771, %v770
      %v775 = vsel %vm525, %v658, 0
      %777 = vmatprep.subr.bf16.mxu0 0
      %778 = vmatpush1.bf16.msra.mxu0 %v772
      %779 = vmatprep.subr.bf16.mxu0 0
      %780 = vmatpush1.bf16.msra.mxu0 0
      %781 = vmatprep.subr.bf16.mxu0 0
      %782 = vmatpush1.bf16.msra.mxu0 0
      %783 = vmatprep.subr.bf16.mxu0 0
      %784 = vmatpush1.bf16.msra.mxu0 0
      %785 = vmatprep.subr.bf16.mxu0 0
      %786 = vmatpush1.bf16.msra.mxu0 0
      %787 = vmatprep.subr.bf16.mxu0 0
      %788 = vmatpush1.bf16.msra.mxu0 0
      %789 = vmatprep.subr.bf16.mxu0 0
      %790 = vmatpush1.bf16.msra.mxu0 0
      %791 = vmatprep.subr.bf16.mxu0 0
      %792 = vmatpush1.bf16.msra.mxu0 0
      %793 = vmatprep.subr.bf16.mxu0 0
      %794 = vmatpush1.bf16.msra.mxu0 0
      %795 = vmatprep.subr.bf16.mxu0 0
      %796 = vmatpush1.bf16.msra.mxu0 0
      %797 = vmatprep.subr.bf16.mxu0 0
      %798 = vmatpush1.bf16.msra.mxu0 0
      %799 = vmatprep.subr.bf16.mxu0 0
      %800 = vmatpush1.bf16.msra.mxu0 0
      %801 = vmatprep.subr.bf16.mxu0 0
      %802 = vmatpush1.bf16.msra.mxu0 0
      %803 = vmatprep.subr.bf16.mxu0 0
      %804 = vmatpush1.bf16.msra.mxu0 0
      %805 = vmatprep.subr.bf16.mxu0 0
      %806 = vmatpush1.bf16.msra.mxu0 0
      %807 = vmatprep.subr.bf16.mxu0 0
      %808 = vmatpush1.bf16.msra.mxu0 0
      %809 = vmatprep.mubr.bf16.mxu0 0
      %810 = vmatmul.mubr.bf16.gmra.mrb[0].mxu0 %v775
      %v811 = vpop.f32.mrb[0].mxu0
      %v812 = vadd.f32 0.0, %v811
      %v813 = vpop.f32.mrb[0].mxu0
      %v814 = vpop.f32.mrb[0].mxu0
      %v815 = vadd.f32 0.0, %v814
      %v816 = vpop.f32.mrb[0].mxu0
      %817 = vdwg.mxu0
      %v820 = vunpack.c.l.b16 %v666
      %v821 = vunpack.c.l.b16 %v667
      %v822 = vpack.c.b16 %v821, %v820
      %v825 = vsel %vm525, %v659, 0
      %827 = vmatprep.subr.bf16.mxu0 0
      %828 = vmatpush1.bf16.msra.mxu0 %v822
      %829 = vmatprep.subr.bf16.mxu0 0
      %830 = vmatpush1.bf16.msra.mxu0 0
      %831 = vmatprep.subr.bf16.mxu0 0
      %832 = vmatpush1.bf16.msra.mxu0 0
      %833 = vmatprep.subr.bf16.mxu0 0
      %834 = vmatpush1.bf16.msra.mxu0 0
      %835 = vmatprep.subr.bf16.mxu0 0
      %836 = vmatpush1.bf16.msra.mxu0 0
      %837 = vmatprep.subr.bf16.mxu0 0
      %838 = vmatpush1.bf16.msra.mxu0 0
      %839 = vmatprep.subr.bf16.mxu0 0
      %840 = vmatpush1.bf16.msra.mxu0 0
      %841 = vmatprep.subr.bf16.mxu0 0
      %842 = vmatpush1.bf16.msra.mxu0 0
      %843 = vmatprep.subr.bf16.mxu0 0
      %844 = vmatpush1.bf16.msra.mxu0 0
      %845 = vmatprep.subr.bf16.mxu0 0
      %846 = vmatpush1.bf16.msra.mxu0 0
      %847 = vmatprep.subr.bf16.mxu0 0
      %848 = vmatpush1.bf16.msra.mxu0 0
      %849 = vmatprep.subr.bf16.mxu0 0
      %850 = vmatpush1.bf16.msra.mxu0 0
      %851 = vmatprep.subr.bf16.mxu0 0
      %852 = vmatpush1.bf16.msra.mxu0 0
      %853 = vmatprep.subr.bf16.mxu0 0
      %854 = vmatpush1.bf16.msra.mxu0 0
      %855 = vmatprep.subr.bf16.mxu0 0
      %856 = vmatpush1.bf16.msra.mxu0 0
      %857 = vmatprep.subr.bf16.mxu0 0
      %858 = vmatpush1.bf16.msra.mxu0 0
      %859 = vmatprep.mubr.bf16.mxu0 0
      %860 = vmatmul.mubr.bf16.gmra.mrb[0].mxu0 %v825
      %v861 = vpop.f32.mrb[0].mxu0
      %v862 = vadd.f32 0.0, %v861
      %v863 = vpop.f32.mrb[0].mxu0
      %v864 = vpop.f32.mrb[0].mxu0
      %v865 = vadd.f32 0.0, %v864
      %v866 = vpop.f32.mrb[0].mxu0
      %867 = vdwg.mxu0
      %vm868 = vcmask 261120
      %v869 = vsel %vm868, %v712, 0.0
      %v870 = vsel %vm868, %v762, 0.0
      %v871 = vadd.f32 %v869, %v870
      %v872 = vsel %vm868, %v812, 0.0
      %v873 = vadd.f32 %v871, %v872
      %v874 = vsel %vm868, %v862, 0.0
      %v875 = vadd.f32 %v873, %v874
      %v876 = vsel %vm868, %v715, 0.0
      %v877 = vsel %vm868, %v765, 0.0
      %v878 = vadd.f32 %v876, %v877
      %v879 = vsel %vm868, %v815, 0.0
      %v880 = vadd.f32 %v878, %v879
      %v881 = vsel %vm868, %v865, 0.0
      %v882 = vadd.f32 %v880, %v881
      %v883 = vlaneseq
      %v884 = vshrl.u32 %v883, 7
      %v885 = vsub.s32 0, %v884
      %v886 = vrot.slane %v382, %v885
      %v887 = vadd.f32 %v875, %v886
      %v888 = vadd.f32 %v882, %v886
      %v889 = vsel %vm868, %v887, 0.0
      %v890 = vrot.slane %v889, 4
      %v891 = vadd.f32 %v889, %v890
      %v892 = vrot.slane %v891, 2
      %v893 = vadd.f32 %v891, %v892
      %v894 = vrot.slane %v893, 1
      %v895 = vadd.f32 %v893, %v894
      %v896 = vsel %vm868, %v888, 0.0
      %v897 = vrot.slane %v896, 4
      %v898 = vadd.f32 %v896, %v897
      %v899 = vrot.slane %v898, 2
      %v900 = vadd.f32 %v898, %v899
      %v901 = vrot.slane %v900, 1
      %v902 = vadd.f32 %v900, %v901
      %v903 = vmul.f32 %v895, 0.125
      %v904 = vmul.f32 %v902, 0.125
      %v905 = vmul.f32 %v887, %v887
      %v906 = vmul.f32 %v888, %v888
      %v907 = vsel %vm868, %v905, 0.0
      %v908 = vrot.slane %v907, 4
      %v909 = vadd.f32 %v907, %v908
      %v910 = vrot.slane %v909, 2
      %v911 = vadd.f32 %v909, %v910
      %v912 = vrot.slane %v911, 1
      %v913 = vadd.f32 %v911, %v912
      %v914 = vsel %vm868, %v906, 0.0
      %v915 = vrot.slane %v914, 4
      %v916 = vadd.f32 %v914, %v915
      %v917 = vrot.slane %v916, 2
      %v918 = vadd.f32 %v916, %v917
      %v919 = vrot.slane %v918, 1
      %v920 = vadd.f32 %v918, %v919
      %v921 = vmul.f32 %v913, 0.125
      %v922 = vmul.f32 %v920, 0.125
      %v923 = vmul.f32 %v903, %v903
      %v924 = vmul.f32 %v904, %v904
      %v925 = vsub.f32 %v921, %v923
      %v926 = vsub.f32 %v922, %v924
      %v927 = vmax.f32 %v925, 0.0
      %v928 = vmax.f32 %v926, 0.0
      %v929 = vadd.f32 %v927, 1e-05
      %v930 = vadd.f32 %v928, 1e-05
      %v931 = vrsqrt.pop %v929
      %v932 = vrsqrt.pop %v930
      %v933 = vmul.f32 %v382, %v931
      %v934 = vmul.f32 %v382, %v932
      %v935 = vmul.f32 %v903, %v933
      %v936 = vmul.f32 %v904, %v934
      %v939 = vrot.slane %v935, 7
      %v940 = vrot.slane %v936, 7
      %v943 = vsub.f32 %v382, %v939
      %v944 = vsub.f32 %v382, %v940
      %v945 = vlaneseq
      %v946 = vshrl.u32 %v945, 7
      %v947 = vsub.s32 1, %v946
      %v948 = vrot.slane %v933, %v947
      %v949 = vlaneseq
      %v950 = vshrl.u32 %v949, 7
      %v951 = vsub.s32 1, %v950
      %v952 = vrot.slane %v934, %v951
      %v953 = vmul.f32 %v887, %v948
      %v954 = vmul.f32 %v888, %v952
      %v955 = vlaneseq
      %v956 = vshrl.u32 %v955, 7
      %v957 = vsub.s32 2, %v956
      %v958 = vrot.slane %v943, %v957
      %v959 = vlaneseq
      %v960 = vshrl.u32 %v959, 7
      %v961 = vsub.s32 2, %v960
      %v962 = vrot.slane %v944, %v961
      %v963 = vadd.f32 %v953, %v958
      %v964 = vadd.f32 %v954, %v962
      %v965 = vmax.f32 %v963, 0.0
      %v966 = vmax.f32 %v964, 0.0
      %v967 = vld [vmem:[%s374] sm:$0xf]
      %v968 = vld [vmem:[%s374 + $0x4] sm:$0xf]
      %v969 = vld [vmem:[%s374 + $0x8] sm:$0xf]
      %v970 = vld [vmem:[%s374 + $0xc] sm:$0xf]
      %v971 = vld [vmem:[%s374 + $0x10] sm:$0xf]
      %v972 = vld [vmem:[%s374 + $0x14] sm:$0xf]
      %v973 = vld [vmem:[%s374 + $0x18] sm:$0xf]
      %v974 = vld [vmem:[%s374 + $0x1c] sm:$0xf]
      %v975 = vld [vmem:[%s374 + $0x20] sm:$0xf]
      %v976 = vld [vmem:[%s374 + $0x24] sm:$0xf]
      %v977 = vld [vmem:[%s374 + $0x28] sm:$0xf]
      %v978 = vld [vmem:[%s374 + $0x2c] sm:$0xf]
      %v979 = vld [vmem:[%s374 + $0x30] sm:$0xf]
      %v980 = vld [vmem:[%s374 + $0x34] sm:$0xf]
      %v981 = vld [vmem:[%s374 + $0x38] sm:$0xf]
      %v982 = vld [vmem:[%s374 + $0x3c] sm:$0xf]
      %v983 = vld [vmem:[%s374 + $0x40] sm:$0xf]
      %v984 = vld [vmem:[%s374 + $0x44] sm:$0xf]
      %v985 = vld [vmem:[%s374 + $0x48] sm:$0xf]
      %v986 = vld [vmem:[%s374 + $0x4c] sm:$0xf]
      %v987 = vld [vmem:[%s374 + $0x50] sm:$0xf]
      %v988 = vld [vmem:[%s374 + $0x54] sm:$0xf]
      %v989 = vld [vmem:[%s374 + $0x58] sm:$0xf]
      %v990 = vld [vmem:[%s374 + $0x5c] sm:$0xf]
      %v991 = vld [vmem:[%s374 + $0x60] sm:$0xf]
      %v992 = vld [vmem:[%s374 + $0x64] sm:$0xf]
      %v993 = vld [vmem:[%s374 + $0x68] sm:$0xf]
      %v994 = vld [vmem:[%s374 + $0x6c] sm:$0xf]
      %v995 = vld [vmem:[%s374 + $0x70] sm:$0xf]
      %v996 = vld [vmem:[%s374 + $0x74] sm:$0xf]
      %v997 = vld [vmem:[%s374 + $0x78] sm:$0xf]
      %v998 = vld [vmem:[%s374 + $0x7c] sm:$0xf]
      %v999 = vld [vmem:[%s3] sm:$0xf]
      %v1000 = vld [vmem:[%s3 + $0x4] sm:$0xf]
      %v1001 = vlaneseq
      %v1002 = vshrl.u32 %v1001, 7
      %v1003 = vsub.s32 3, %v1002
      %v1004 = vrot.slane %v381, %v1003
      %v1037 = vunpack.c.l.b16 %v967
      %v1038 = vunpack.c.l.b16 %v968
      %v1039 = vunpack.c.l.b16 %v969
      %v1040 = vunpack.c.l.b16 %v970
      %v1041 = vunpack.c.l.b16 %v971
      %v1042 = vunpack.c.l.b16 %v972
      %v1043 = vunpack.c.l.b16 %v973
      %v1044 = vunpack.c.l.b16 %v974
      %v1045 = vunpack.c.l.b16 %v975
      %v1046 = vunpack.c.l.b16 %v976
      %v1047 = vunpack.c.l.b16 %v977
      %v1048 = vunpack.c.l.b16 %v978
      %v1049 = vunpack.c.l.b16 %v979
      %v1050 = vunpack.c.l.b16 %v980
      %v1051 = vunpack.c.l.b16 %v981
      %v1052 = vunpack.c.l.b16 %v982
      %v1053 = vunpack.c.l.b16 %v983
      %v1054 = vunpack.c.l.b16 %v984
      %v1055 = vunpack.c.l.b16 %v985
      %v1056 = vunpack.c.l.b16 %v986
      %v1057 = vunpack.c.l.b16 %v987
      %v1058 = vunpack.c.l.b16 %v988
      %v1059 = vunpack.c.l.b16 %v989
      %v1060 = vunpack.c.l.b16 %v990
      %v1061 = vunpack.c.l.b16 %v991
      %v1062 = vunpack.c.l.b16 %v992
      %v1063 = vunpack.c.l.b16 %v993
      %v1064 = vunpack.c.l.b16 %v994
      %v1065 = vunpack.c.l.b16 %v995
      %v1066 = vunpack.c.l.b16 %v996
      %v1067 = vunpack.c.l.b16 %v997
      %v1068 = vunpack.c.l.b16 %v998
      %v1069 = vpack.c.b16 %v1038, %v1037
      %v1070 = vpack.c.b16 %v1040, %v1039
      %v1071 = vpack.c.b16 %v1042, %v1041
      %v1072 = vpack.c.b16 %v1044, %v1043
      %v1073 = vpack.c.b16 %v1046, %v1045
      %v1074 = vpack.c.b16 %v1048, %v1047
      %v1075 = vpack.c.b16 %v1050, %v1049
      %v1076 = vpack.c.b16 %v1052, %v1051
      %v1077 = vpack.c.b16 %v1054, %v1053
      %v1078 = vpack.c.b16 %v1056, %v1055
      %v1079 = vpack.c.b16 %v1058, %v1057
      %v1080 = vpack.c.b16 %v1060, %v1059
      %v1081 = vpack.c.b16 %v1062, %v1061
      %v1082 = vpack.c.b16 %v1064, %v1063
      %v1083 = vpack.c.b16 %v1066, %v1065
      %v1084 = vpack.c.b16 %v1068, %v1067
      %v1087 = vunpack.c.l.b16 %v999
      %v1088 = vunpack.c.l.b16 %v1000
      %v1089 = vpack.c.b16 %v1088, %v1087
      %v1092 = vsel %vm525, %v1069, 0
      %v1095 = vsel %vm525, %v1070, 0
      %v1098 = vsel %vm525, %v1071, 0
      %v1101 = vsel %vm525, %v1072, 0
      %v1104 = vsel %vm525, %v1073, 0
      %v1107 = vsel %vm525, %v1074, 0
      %v1110 = vsel %vm525, %v1075, 0
      %v1113 = vsel %vm525, %v1076, 0
      %v1116 = vsel %vm525, %v1077, 0
      %v1119 = vsel %vm525, %v1078, 0
      %v1122 = vsel %vm525, %v1079, 0
      %v1125 = vsel %vm525, %v1080, 0
      %v1128 = vsel %vm525, %v1081, 0
      %v1131 = vsel %vm525, %v1082, 0
      %v1134 = vsel %vm525, %v1083, 0
      %v1137 = vsel %vm525, %v1084, 0
      %1139 = vmatprep.subr.bf16.mxu0 0
      %1140 = vmatpush1.bf16.msra.mxu0 %v1089
      %1141 = vmatprep.subr.bf16.mxu0 0
      %1142 = vmatpush1.bf16.msra.mxu0 0
      %1143 = vmatprep.subr.bf16.mxu0 0
      %1144 = vmatpush1.bf16.msra.mxu0 0
      %1145 = vmatprep.subr.bf16.mxu0 0
      %1146 = vmatpush1.bf16.msra.mxu0 0
      %1147 = vmatprep.subr.bf16.mxu0 0
      %1148 = vmatpush1.bf16.msra.mxu0 0
      %1149 = vmatprep.subr.bf16.mxu0 0
      %1150 = vmatpush1.bf16.msra.mxu0 0
      %1151 = vmatprep.subr.bf16.mxu0 0
      %1152 = vmatpush1.bf16.msra.mxu0 0
      %1153 = vmatprep.subr.bf16.mxu0 0
      %1154 = vmatpush1.bf16.msra.mxu0 0
      %1155 = vmatprep.subr.bf16.mxu0 0
      %1156 = vmatpush1.bf16.msra.mxu0 0
      %1157 = vmatprep.subr.bf16.mxu0 0
      %1158 = vmatpush1.bf16.msra.mxu0 0
      %1159 = vmatprep.subr.bf16.mxu0 0
      %1160 = vmatpush1.bf16.msra.mxu0 0
      %1161 = vmatprep.subr.bf16.mxu0 0
      %1162 = vmatpush1.bf16.msra.mxu0 0
      %1163 = vmatprep.subr.bf16.mxu0 0
      %1164 = vmatpush1.bf16.msra.mxu0 0
      %1165 = vmatprep.subr.bf16.mxu0 0
      %1166 = vmatpush1.bf16.msra.mxu0 0
      %1167 = vmatprep.subr.bf16.mxu0 0
      %1168 = vmatpush1.bf16.msra.mxu0 0
      %1169 = vmatprep.subr.bf16.mxu0 0
      %1170 = vmatpush1.bf16.msra.mxu0 0
      %1171 = vmatprep.mubr.bf16.mxu0 0
      %1172 = vmatmul.mubr.bf16.gmra.mrb[0].mxu0 %v1092
      %v1173 = vpop.f32.mrb[0].mxu0
      %v1174 = vadd.f32 %v1004, %v1173
      %v1175 = vpop.f32.mrb[0].mxu0
      %v1176 = vpop.f32.mrb[0].mxu0
      %v1177 = vadd.f32 %v1004, %v1176
      %v1178 = vpop.f32.mrb[0].mxu0
      %1179 = vmatprep.mubr.bf16.mxu0 0
      %1180 = vmatmul.mubr.bf16.gmra.mrb[0].mxu0 %v1095
      %v1181 = vpop.f32.mrb[0].mxu0
      %v1182 = vadd.f32 %v1004, %v1181
      %v1183 = vpop.f32.mrb[0].mxu0
      %v1184 = vpop.f32.mrb[0].mxu0
      %v1185 = vadd.f32 %v1004, %v1184
      %v1186 = vpop.f32.mrb[0].mxu0
      %1187 = vmatprep.mubr.bf16.mxu0 0
      %1188 = vmatmul.mubr.bf16.gmra.mrb[0].mxu0 %v1098
      %v1189 = vpop.f32.mrb[0].mxu0
      %v1190 = vadd.f32 %v1004, %v1189
      %v1191 = vpop.f32.mrb[0].mxu0
      %v1192 = vpop.f32.mrb[0].mxu0
      %v1193 = vadd.f32 %v1004, %v1192
      %v1194 = vpop.f32.mrb[0].mxu0
      %1195 = vmatprep.mubr.bf16.mxu0 0
      %1196 = vmatmul.mubr.bf16.gmra.mrb[0].mxu0 %v1101
      %v1197 = vpop.f32.mrb[0].mxu0
      %v1198 = vadd.f32 %v1004, %v1197
      %v1199 = vpop.f32.mrb[0].mxu0
      %v1200 = vpop.f32.mrb[0].mxu0
      %v1201 = vadd.f32 %v1004, %v1200
      %v1202 = vpop.f32.mrb[0].mxu0
      %1203 = vmatprep.mubr.bf16.mxu0 0
      %1204 = vmatmul.mubr.bf16.gmra.mrb[0].mxu0 %v1104
      %v1205 = vpop.f32.mrb[0].mxu0
      %v1206 = vadd.f32 %v1004, %v1205
      %v1207 = vpop.f32.mrb[0].mxu0
      %v1208 = vpop.f32.mrb[0].mxu0
      %v1209 = vadd.f32 %v1004, %v1208
      %v1210 = vpop.f32.mrb[0].mxu0
      %1211 = vmatprep.mubr.bf16.mxu0 0
      %1212 = vmatmul.mubr.bf16.gmra.mrb[0].mxu0 %v1107
      %v1213 = vpop.f32.mrb[0].mxu0
      %v1214 = vadd.f32 %v1004, %v1213
      %v1215 = vpop.f32.mrb[0].mxu0
      %v1216 = vpop.f32.mrb[0].mxu0
      %v1217 = vadd.f32 %v1004, %v1216
      %v1218 = vpop.f32.mrb[0].mxu0
      %1219 = vmatprep.mubr.bf16.mxu0 0
      %1220 = vmatmul.mubr.bf16.gmra.mrb[0].mxu0 %v1110
      %v1221 = vpop.f32.mrb[0].mxu0
      %v1222 = vadd.f32 %v1004, %v1221
      %v1223 = vpop.f32.mrb[0].mxu0
      %v1224 = vpop.f32.mrb[0].mxu0
      %v1225 = vadd.f32 %v1004, %v1224
      %v1226 = vpop.f32.mrb[0].mxu0
      %1227 = vmatprep.mubr.bf16.mxu0 0
      %1228 = vmatmul.mubr.bf16.gmra.mrb[0].mxu0 %v1113
      %v1229 = vpop.f32.mrb[0].mxu0
      %v1230 = vadd.f32 %v1004, %v1229
      %v1231 = vpop.f32.mrb[0].mxu0
      %v1232 = vpop.f32.mrb[0].mxu0
      %v1233 = vadd.f32 %v1004, %v1232
      %v1234 = vpop.f32.mrb[0].mxu0
      %1235 = vmatprep.mubr.bf16.mxu0 0
      %1236 = vmatmul.mubr.bf16.gmra.mrb[0].mxu0 %v1116
      %v1237 = vpop.f32.mrb[0].mxu0
      %v1238 = vadd.f32 %v1004, %v1237
      %v1239 = vpop.f32.mrb[0].mxu0
      %v1240 = vpop.f32.mrb[0].mxu0
      %v1241 = vadd.f32 %v1004, %v1240
      %v1242 = vpop.f32.mrb[0].mxu0
      %1243 = vmatprep.mubr.bf16.mxu0 0
      %1244 = vmatmul.mubr.bf16.gmra.mrb[0].mxu0 %v1119
      %v1245 = vpop.f32.mrb[0].mxu0
      %v1246 = vadd.f32 %v1004, %v1245
      %v1247 = vpop.f32.mrb[0].mxu0
      %v1248 = vpop.f32.mrb[0].mxu0
      %v1249 = vadd.f32 %v1004, %v1248
      %v1250 = vpop.f32.mrb[0].mxu0
      %1251 = vmatprep.mubr.bf16.mxu0 0
      %1252 = vmatmul.mubr.bf16.gmra.mrb[0].mxu0 %v1122
      %v1253 = vpop.f32.mrb[0].mxu0
      %v1254 = vadd.f32 %v1004, %v1253
      %v1255 = vpop.f32.mrb[0].mxu0
      %v1256 = vpop.f32.mrb[0].mxu0
      %v1257 = vadd.f32 %v1004, %v1256
      %v1258 = vpop.f32.mrb[0].mxu0
      %1259 = vmatprep.mubr.bf16.mxu0 0
      %1260 = vmatmul.mubr.bf16.gmra.mrb[0].mxu0 %v1125
      %v1261 = vpop.f32.mrb[0].mxu0
      %v1262 = vadd.f32 %v1004, %v1261
      %v1263 = vpop.f32.mrb[0].mxu0
      %v1264 = vpop.f32.mrb[0].mxu0
      %v1265 = vadd.f32 %v1004, %v1264
      %v1266 = vpop.f32.mrb[0].mxu0
      %1267 = vmatprep.mubr.bf16.mxu0 0
      %1268 = vmatmul.mubr.bf16.gmra.mrb[0].mxu0 %v1128
      %v1269 = vpop.f32.mrb[0].mxu0
      %v1270 = vadd.f32 %v1004, %v1269
      %v1271 = vpop.f32.mrb[0].mxu0
      %v1272 = vpop.f32.mrb[0].mxu0
      %v1273 = vadd.f32 %v1004, %v1272
      %v1274 = vpop.f32.mrb[0].mxu0
      %1275 = vmatprep.mubr.bf16.mxu0 0
      %1276 = vmatmul.mubr.bf16.gmra.mrb[0].mxu0 %v1131
      %v1277 = vpop.f32.mrb[0].mxu0
      %v1278 = vadd.f32 %v1004, %v1277
      %v1279 = vpop.f32.mrb[0].mxu0
      %v1280 = vpop.f32.mrb[0].mxu0
      %v1281 = vadd.f32 %v1004, %v1280
      %v1282 = vpop.f32.mrb[0].mxu0
      %1283 = vmatprep.mubr.bf16.mxu0 0
      %1284 = vmatmul.mubr.bf16.gmra.mrb[0].mxu0 %v1134
      %v1285 = vpop.f32.mrb[0].mxu0
      %v1286 = vadd.f32 %v1004, %v1285
      %v1287 = vpop.f32.mrb[0].mxu0
      %v1288 = vpop.f32.mrb[0].mxu0
      %v1289 = vadd.f32 %v1004, %v1288
      %v1290 = vpop.f32.mrb[0].mxu0
      %1291 = vmatprep.mubr.bf16.mxu0 0
      %1292 = vmatmul.mubr.bf16.gmra.mrb[0].mxu0 %v1137
      %v1293 = vpop.f32.mrb[0].mxu0
      %v1294 = vadd.f32 %v1004, %v1293
      %v1295 = vpop.f32.mrb[0].mxu0
      %v1296 = vpop.f32.mrb[0].mxu0
      %v1297 = vadd.f32 %v1004, %v1296
      %v1298 = vpop.f32.mrb[0].mxu0
      %1299 = vdwg.mxu0
      %v1300 = vsel %vm525, %v1174, 0.0
      %v1301 = vsel %vm525, %v1182, 0.0
      %v1302 = vadd.f32 %v1300, %v1301
      %v1303 = vsel %vm525, %v1190, 0.0
      %v1304 = vadd.f32 %v1302, %v1303
      %v1305 = vsel %vm525, %v1198, 0.0
      %v1306 = vadd.f32 %v1304, %v1305
      %v1307 = vsel %vm525, %v1206, 0.0
      %v1308 = vadd.f32 %v1306, %v1307
      %v1309 = vsel %vm525, %v1214, 0.0
      %v1310 = vadd.f32 %v1308, %v1309
      %v1311 = vsel %vm525, %v1222, 0.0
      %v1312 = vadd.f32 %v1310, %v1311
      %v1313 = vsel %vm525, %v1230, 0.0
      %v1314 = vadd.f32 %v1312, %v1313
      %v1315 = vsel %vm525, %v1238, 0.0
      %v1316 = vadd.f32 %v1314, %v1315
      %v1317 = vsel %vm525, %v1246, 0.0
      %v1318 = vadd.f32 %v1316, %v1317
      %v1319 = vsel %vm525, %v1254, 0.0
      %v1320 = vadd.f32 %v1318, %v1319
      %v1321 = vsel %vm525, %v1262, 0.0
      %v1322 = vadd.f32 %v1320, %v1321
      %v1323 = vsel %vm525, %v1270, 0.0
      %v1324 = vadd.f32 %v1322, %v1323
      %v1325 = vsel %vm525, %v1278, 0.0
      %v1326 = vadd.f32 %v1324, %v1325
      %v1327 = vsel %vm525, %v1286, 0.0
      %v1328 = vadd.f32 %v1326, %v1327
      %v1329 = vsel %vm525, %v1294, 0.0
      %v1330 = vadd.f32 %v1328, %v1329
      %v1331 = vsel %vm525, %v1177, 0.0
      %v1332 = vsel %vm525, %v1185, 0.0
      %v1333 = vadd.f32 %v1331, %v1332
      %v1334 = vsel %vm525, %v1193, 0.0
      %v1335 = vadd.f32 %v1333, %v1334
      %v1336 = vsel %vm525, %v1201, 0.0
      %v1337 = vadd.f32 %v1335, %v1336
      %v1338 = vsel %vm525, %v1209, 0.0
      %v1339 = vadd.f32 %v1337, %v1338
      %v1340 = vsel %vm525, %v1217, 0.0
      %v1341 = vadd.f32 %v1339, %v1340
      %v1342 = vsel %vm525, %v1225, 0.0
      %v1343 = vadd.f32 %v1341, %v1342
      %v1344 = vsel %vm525, %v1233, 0.0
      %v1345 = vadd.f32 %v1343, %v1344
      %v1346 = vsel %vm525, %v1241, 0.0
      %v1347 = vadd.f32 %v1345, %v1346
      %v1348 = vsel %vm525, %v1249, 0.0
      %v1349 = vadd.f32 %v1347, %v1348
      %v1350 = vsel %vm525, %v1257, 0.0
      %v1351 = vadd.f32 %v1349, %v1350
      %v1352 = vsel %vm525, %v1265, 0.0
      %v1353 = vadd.f32 %v1351, %v1352
      %v1354 = vsel %vm525, %v1273, 0.0
      %v1355 = vadd.f32 %v1353, %v1354
      %v1356 = vsel %vm525, %v1281, 0.0
      %v1357 = vadd.f32 %v1355, %v1356
      %v1358 = vsel %vm525, %v1289, 0.0
      %v1359 = vadd.f32 %v1357, %v1358
      %v1360 = vsel %vm525, %v1297, 0.0
      %v1361 = vadd.f32 %v1359, %v1360
      %v1362 = vsel %vm525, %v1330, 0.0
      %v1363 = vrot.slane %v1362, 4
      %v1364 = vadd.f32 %v1362, %v1363
      %v1365 = vrot.slane %v1364, 2
      %v1366 = vadd.f32 %v1364, %v1365
      %v1367 = vrot.slane %v1366, 1
      %v1368 = vadd.f32 %v1366, %v1367
      %v1369 = vsel %vm525, %v1361, 0.0
      %v1370 = vrot.slane %v1369, 4
      %v1371 = vadd.f32 %v1369, %v1370
      %v1372 = vrot.slane %v1371, 2
      %v1373 = vadd.f32 %v1371, %v1372
      %v1374 = vrot.slane %v1373, 1
      %v1375 = vadd.f32 %v1373, %v1374
      %v1376 = vmul.f32 %v1368, 0.0078125
      %v1377 = vmul.f32 %v1375, 0.0078125
      %v1378 = vmul.f32 %v1174, %v1174
      %v1379 = vmul.f32 %v1177, %v1177
      %v1380 = vmul.f32 %v1182, %v1182
      %v1381 = vmul.f32 %v1185, %v1185
      %v1382 = vmul.f32 %v1190, %v1190
      %v1383 = vmul.f32 %v1193, %v1193
      %v1384 = vmul.f32 %v1198, %v1198
      %v1385 = vmul.f32 %v1201, %v1201
      %v1386 = vmul.f32 %v1206, %v1206
      %v1387 = vmul.f32 %v1209, %v1209
      %v1388 = vmul.f32 %v1214, %v1214
      %v1389 = vmul.f32 %v1217, %v1217
      %v1390 = vmul.f32 %v1222, %v1222
      %v1391 = vmul.f32 %v1225, %v1225
      %v1392 = vmul.f32 %v1230, %v1230
      %v1393 = vmul.f32 %v1233, %v1233
      %v1394 = vmul.f32 %v1238, %v1238
      %v1395 = vmul.f32 %v1241, %v1241
      %v1396 = vmul.f32 %v1246, %v1246
      %v1397 = vmul.f32 %v1249, %v1249
      %v1398 = vmul.f32 %v1254, %v1254
      %v1399 = vmul.f32 %v1257, %v1257
      %v1400 = vmul.f32 %v1262, %v1262
      %v1401 = vmul.f32 %v1265, %v1265
      %v1402 = vmul.f32 %v1270, %v1270
      %v1403 = vmul.f32 %v1273, %v1273
      %v1404 = vmul.f32 %v1278, %v1278
      %v1405 = vmul.f32 %v1281, %v1281
      %v1406 = vmul.f32 %v1286, %v1286
      %v1407 = vmul.f32 %v1289, %v1289
      %v1408 = vmul.f32 %v1294, %v1294
      %v1409 = vmul.f32 %v1297, %v1297
      %v1410 = vsel %vm525, %v1378, 0.0
      %v1411 = vsel %vm525, %v1380, 0.0
      %v1412 = vadd.f32 %v1410, %v1411
      %v1413 = vsel %vm525, %v1382, 0.0
      %v1414 = vadd.f32 %v1412, %v1413
      %v1415 = vsel %vm525, %v1384, 0.0
      %v1416 = vadd.f32 %v1414, %v1415
      %v1417 = vsel %vm525, %v1386, 0.0
      %v1418 = vadd.f32 %v1416, %v1417
      %v1419 = vsel %vm525, %v1388, 0.0
      %v1420 = vadd.f32 %v1418, %v1419
      %v1421 = vsel %vm525, %v1390, 0.0
      %v1422 = vadd.f32 %v1420, %v1421
      %v1423 = vsel %vm525, %v1392, 0.0
      %v1424 = vadd.f32 %v1422, %v1423
      %v1425 = vsel %vm525, %v1394, 0.0
      %v1426 = vadd.f32 %v1424, %v1425
      %v1427 = vsel %vm525, %v1396, 0.0
      %v1428 = vadd.f32 %v1426, %v1427
      %v1429 = vsel %vm525, %v1398, 0.0
      %v1430 = vadd.f32 %v1428, %v1429
      %v1431 = vsel %vm525, %v1400, 0.0
      %v1432 = vadd.f32 %v1430, %v1431
      %v1433 = vsel %vm525, %v1402, 0.0
      %v1434 = vadd.f32 %v1432, %v1433
      %v1435 = vsel %vm525, %v1404, 0.0
      %v1436 = vadd.f32 %v1434, %v1435
      %v1437 = vsel %vm525, %v1406, 0.0
      %v1438 = vadd.f32 %v1436, %v1437
      %v1439 = vsel %vm525, %v1408, 0.0
      %v1440 = vadd.f32 %v1438, %v1439
      %v1441 = vsel %vm525, %v1379, 0.0
      %v1442 = vsel %vm525, %v1381, 0.0
      %v1443 = vadd.f32 %v1441, %v1442
      %v1444 = vsel %vm525, %v1383, 0.0
      %v1445 = vadd.f32 %v1443, %v1444
      %v1446 = vsel %vm525, %v1385, 0.0
      %v1447 = vadd.f32 %v1445, %v1446
      %v1448 = vsel %vm525, %v1387, 0.0
      %v1449 = vadd.f32 %v1447, %v1448
      %v1450 = vsel %vm525, %v1389, 0.0
      %v1451 = vadd.f32 %v1449, %v1450
      %v1452 = vsel %vm525, %v1391, 0.0
      %v1453 = vadd.f32 %v1451, %v1452
      %v1454 = vsel %vm525, %v1393, 0.0
      %v1455 = vadd.f32 %v1453, %v1454
      %v1456 = vsel %vm525, %v1395, 0.0
      %v1457 = vadd.f32 %v1455, %v1456
      %v1458 = vsel %vm525, %v1397, 0.0
      %v1459 = vadd.f32 %v1457, %v1458
      %v1460 = vsel %vm525, %v1399, 0.0
      %v1461 = vadd.f32 %v1459, %v1460
      %v1462 = vsel %vm525, %v1401, 0.0
      %v1463 = vadd.f32 %v1461, %v1462
      %v1464 = vsel %vm525, %v1403, 0.0
      %v1465 = vadd.f32 %v1463, %v1464
      %v1466 = vsel %vm525, %v1405, 0.0
      %v1467 = vadd.f32 %v1465, %v1466
      %v1468 = vsel %vm525, %v1407, 0.0
      %v1469 = vadd.f32 %v1467, %v1468
      %v1470 = vsel %vm525, %v1409, 0.0
      %v1471 = vadd.f32 %v1469, %v1470
      %v1472 = vsel %vm525, %v1440, 0.0
      %v1473 = vrot.slane %v1472, 4
      %v1474 = vadd.f32 %v1472, %v1473
      %v1475 = vrot.slane %v1474, 2
      %v1476 = vadd.f32 %v1474, %v1475
      %v1477 = vrot.slane %v1476, 1
      %v1478 = vadd.f32 %v1476, %v1477
      %v1479 = vsel %vm525, %v1471, 0.0
      %v1480 = vrot.slane %v1479, 4
      %v1481 = vadd.f32 %v1479, %v1480
      %v1482 = vrot.slane %v1481, 2
      %v1483 = vadd.f32 %v1481, %v1482
      %v1484 = vrot.slane %v1483, 1
      %v1485 = vadd.f32 %v1483, %v1484
      %v1486 = vmul.f32 %v1478, 0.0078125
      %v1487 = vmul.f32 %v1485, 0.0078125
      %v1488 = vmul.f32 %v1376, %v1376
      %v1489 = vmul.f32 %v1377, %v1377
      %v1490 = vsub.f32 %v1486, %v1488
      %v1491 = vsub.f32 %v1487, %v1489
      %v1492 = vmax.f32 %v1490, 0.0
      %v1493 = vmax.f32 %v1491, 0.0
      %v1494 = vadd.f32 %v1492, 1e-05
      %v1495 = vadd.f32 %v1493, 1e-05
      %v1496 = vrsqrt.pop %v1494
      %v1497 = vrsqrt.pop %v1495
      %v1498 = vmul.f32 %v381, %v1496
      %v1499 = vmul.f32 %v381, %v1497
      %v1500 = vmul.f32 %v1376, %v1498
      %v1501 = vmul.f32 %v1377, %v1499
      %v1504 = vrot.slane %v1500, 7
      %v1505 = vrot.slane %v1501, 7
      %v1508 = vsub.f32 %v381, %v1504
      %v1509 = vsub.f32 %v381, %v1505
      %v1510 = vlaneseq
      %v1511 = vshrl.u32 %v1510, 7
      %v1512 = vsub.s32 4, %v1511
      %v1513 = vrot.slane %v1498, %v1512
      %v1514 = vlaneseq
      %v1515 = vshrl.u32 %v1514, 7
      %v1516 = vsub.s32 4, %v1515
      %v1517 = vrot.slane %v1499, %v1516
      %v1518 = vmul.f32 %v1174, %v1513
      %v1519 = vmul.f32 %v1177, %v1517
      %v1520 = vmul.f32 %v1182, %v1513
      %v1521 = vmul.f32 %v1185, %v1517
      %v1522 = vmul.f32 %v1190, %v1513
      %v1523 = vmul.f32 %v1193, %v1517
      %v1524 = vmul.f32 %v1198, %v1513
      %v1525 = vmul.f32 %v1201, %v1517
      %v1526 = vmul.f32 %v1206, %v1513
      %v1527 = vmul.f32 %v1209, %v1517
      %v1528 = vmul.f32 %v1214, %v1513
      %v1529 = vmul.f32 %v1217, %v1517
      %v1530 = vmul.f32 %v1222, %v1513
      %v1531 = vmul.f32 %v1225, %v1517
      %v1532 = vmul.f32 %v1230, %v1513
      %v1533 = vmul.f32 %v1233, %v1517
      %v1534 = vmul.f32 %v1238, %v1513
      %v1535 = vmul.f32 %v1241, %v1517
      %v1536 = vmul.f32 %v1246, %v1513
      %v1537 = vmul.f32 %v1249, %v1517
      %v1538 = vmul.f32 %v1254, %v1513
      %v1539 = vmul.f32 %v1257, %v1517
      %v1540 = vmul.f32 %v1262, %v1513
      %v1541 = vmul.f32 %v1265, %v1517
      %v1542 = vmul.f32 %v1270, %v1513
      %v1543 = vmul.f32 %v1273, %v1517
      %v1544 = vmul.f32 %v1278, %v1513
      %v1545 = vmul.f32 %v1281, %v1517
      %v1546 = vmul.f32 %v1286, %v1513
      %v1547 = vmul.f32 %v1289, %v1517
      %v1548 = vmul.f32 %v1294, %v1513
      %v1549 = vmul.f32 %v1297, %v1517
      %v1550 = vlaneseq
      %v1551 = vshrl.u32 %v1550, 7
      %v1552 = vsub.s32 5, %v1551
      %v1553 = vrot.slane %v1508, %v1552
      %v1554 = vlaneseq
      %v1555 = vshrl.u32 %v1554, 7
      %v1556 = vsub.s32 5, %v1555
      %v1557 = vrot.slane %v1509, %v1556
      %v1558 = vadd.f32 %v1518, %v1553
      %v1559 = vadd.f32 %v1519, %v1557
      %v1560 = vadd.f32 %v1520, %v1553
      %v1561 = vadd.f32 %v1521, %v1557
      %v1562 = vadd.f32 %v1522, %v1553
      %v1563 = vadd.f32 %v1523, %v1557
      %v1564 = vadd.f32 %v1524, %v1553
      %v1565 = vadd.f32 %v1525, %v1557
      %v1566 = vadd.f32 %v1526, %v1553
      %v1567 = vadd.f32 %v1527, %v1557
      %v1568 = vadd.f32 %v1528, %v1553
      %v1569 = vadd.f32 %v1529, %v1557
      %v1570 = vadd.f32 %v1530, %v1553
      %v1571 = vadd.f32 %v1531, %v1557
      %v1572 = vadd.f32 %v1532, %v1553
      %v1573 = vadd.f32 %v1533, %v1557
      %v1574 = vadd.f32 %v1534, %v1553
      %v1575 = vadd.f32 %v1535, %v1557
      %v1576 = vadd.f32 %v1536, %v1553
      %v1577 = vadd.f32 %v1537, %v1557
      %v1578 = vadd.f32 %v1538, %v1553
      %v1579 = vadd.f32 %v1539, %v1557
      %v1580 = vadd.f32 %v1540, %v1553
      %v1581 = vadd.f32 %v1541, %v1557
      %v1582 = vadd.f32 %v1542, %v1553
      %v1583 = vadd.f32 %v1543, %v1557
      %v1584 = vadd.f32 %v1544, %v1553
      %v1585 = vadd.f32 %v1545, %v1557
      %v1586 = vadd.f32 %v1546, %v1553
      %v1587 = vadd.f32 %v1547, %v1557
      %v1588 = vadd.f32 %v1548, %v1553
      %v1589 = vadd.f32 %v1549, %v1557
      %v1590 = vmax.f32 %v1558, 0.0
      %v1591 = vmax.f32 %v1559, 0.0
      %v1592 = vmax.f32 %v1560, 0.0
      %v1593 = vmax.f32 %v1561, 0.0
      %v1594 = vmax.f32 %v1562, 0.0
      %v1595 = vmax.f32 %v1563, 0.0
      %v1596 = vmax.f32 %v1564, 0.0
      %v1597 = vmax.f32 %v1565, 0.0
      %v1598 = vmax.f32 %v1566, 0.0
      %v1599 = vmax.f32 %v1567, 0.0
      %v1600 = vmax.f32 %v1568, 0.0
      %v1601 = vmax.f32 %v1569, 0.0
      %v1602 = vmax.f32 %v1570, 0.0
      %v1603 = vmax.f32 %v1571, 0.0
      %v1604 = vmax.f32 %v1572, 0.0
      %v1605 = vmax.f32 %v1573, 0.0
      %v1606 = vmax.f32 %v1574, 0.0
      %v1607 = vmax.f32 %v1575, 0.0
      %v1608 = vmax.f32 %v1576, 0.0
      %v1609 = vmax.f32 %v1577, 0.0
      %v1610 = vmax.f32 %v1578, 0.0
      %v1611 = vmax.f32 %v1579, 0.0
      %v1612 = vmax.f32 %v1580, 0.0
      %v1613 = vmax.f32 %v1581, 0.0
      %v1614 = vmax.f32 %v1582, 0.0
      %v1615 = vmax.f32 %v1583, 0.0
      %v1616 = vmax.f32 %v1584, 0.0
      %v1617 = vmax.f32 %v1585, 0.0
      %v1618 = vmax.f32 %v1586, 0.0
      %v1619 = vmax.f32 %v1587, 0.0
      %v1620 = vmax.f32 %v1588, 0.0
      %v1621 = vmax.f32 %v1589, 0.0
      %v1622 = vpack.c.bf16 %v1591, %v1590
      %v1623 = vpack.c.bf16 %v1593, %v1592
      %v1624 = vpack.c.bf16 %v1595, %v1594
      %v1625 = vpack.c.bf16 %v1597, %v1596
      %v1626 = vpack.c.bf16 %v1599, %v1598
      %v1627 = vpack.c.bf16 %v1601, %v1600
      %v1628 = vpack.c.bf16 %v1603, %v1602
      %v1629 = vpack.c.bf16 %v1605, %v1604
      %v1630 = vpack.c.bf16 %v1607, %v1606
      %v1631 = vpack.c.bf16 %v1609, %v1608
      %v1632 = vpack.c.bf16 %v1611, %v1610
      %v1633 = vpack.c.bf16 %v1613, %v1612
      %v1634 = vpack.c.bf16 %v1615, %v1614
      %v1635 = vpack.c.bf16 %v1617, %v1616
      %v1636 = vpack.c.bf16 %v1619, %v1618
      %v1637 = vpack.c.bf16 %v1621, %v1620
      %v1638 = vld [vmem:[%s5] sm:$0xf]
      %v1639 = vld [vmem:[%s5 + $0x4] sm:$0xf]
      %v1640 = vld [vmem:[%s5 + $0x8] sm:$0xf]
      %v1641 = vld [vmem:[%s5 + $0xc] sm:$0xf]
      %v1642 = vld [vmem:[%s5 + $0x10] sm:$0xf]
      %v1643 = vld [vmem:[%s5 + $0x14] sm:$0xf]
      %v1644 = vld [vmem:[%s5 + $0x18] sm:$0xf]
      %v1645 = vld [vmem:[%s5 + $0x1c] sm:$0xf]
      %v1646 = vld [vmem:[%s5 + $0x20] sm:$0xf]
      %v1647 = vld [vmem:[%s5 + $0x24] sm:$0xf]
      %v1648 = vld [vmem:[%s5 + $0x28] sm:$0xf]
      %v1649 = vld [vmem:[%s5 + $0x2c] sm:$0xf]
      %v1650 = vld [vmem:[%s5 + $0x30] sm:$0xf]
      %v1651 = vld [vmem:[%s5 + $0x34] sm:$0xf]
      %v1652 = vld [vmem:[%s5 + $0x38] sm:$0xf]
      %v1653 = vld [vmem:[%s5 + $0x3c] sm:$0xf]
      %v1654 = vld [vmem:[%s5 + $0x40] sm:$0xf]
      %v1655 = vld [vmem:[%s5 + $0x44] sm:$0xf]
      %v1656 = vld [vmem:[%s5 + $0x48] sm:$0xf]
      %v1657 = vld [vmem:[%s5 + $0x4c] sm:$0xf]
      %v1658 = vld [vmem:[%s5 + $0x50] sm:$0xf]
      %v1659 = vld [vmem:[%s5 + $0x54] sm:$0xf]
      %v1660 = vld [vmem:[%s5 + $0x58] sm:$0xf]
      %v1661 = vld [vmem:[%s5 + $0x5c] sm:$0xf]
      %v1662 = vld [vmem:[%s5 + $0x60] sm:$0xf]
      %v1663 = vld [vmem:[%s5 + $0x64] sm:$0xf]
      %v1664 = vld [vmem:[%s5 + $0x68] sm:$0xf]
      %v1665 = vld [vmem:[%s5 + $0x6c] sm:$0xf]
      %v1666 = vld [vmem:[%s5 + $0x70] sm:$0xf]
      %v1667 = vld [vmem:[%s5 + $0x74] sm:$0xf]
      %v1668 = vld [vmem:[%s5 + $0x78] sm:$0xf]
      %v1669 = vld [vmem:[%s5 + $0x7c] sm:$0xf]
      %v1672 = vunpack.c.l.b16 %v1638
      %v1673 = vunpack.c.l.b16 %v1639
      %v1674 = vpack.c.b16 %v1673, %v1672
      %v1677 = vsel %vm525, %v1622, 0
      %1679 = vmatprep.subr.bf16.mxu0 0
      %1680 = vmatpush1.bf16.msra.mxu0 %v1674
      %1681 = vmatprep.subr.bf16.mxu0 0
      %1682 = vmatpush1.bf16.msra.mxu0 0
      %1683 = vmatprep.subr.bf16.mxu0 0
      %1684 = vmatpush1.bf16.msra.mxu0 0
      %1685 = vmatprep.subr.bf16.mxu0 0
      %1686 = vmatpush1.bf16.msra.mxu0 0
      %1687 = vmatprep.subr.bf16.mxu0 0
      %1688 = vmatpush1.bf16.msra.mxu0 0
      %1689 = vmatprep.subr.bf16.mxu0 0
      %1690 = vmatpush1.bf16.msra.mxu0 0
      %1691 = vmatprep.subr.bf16.mxu0 0
      %1692 = vmatpush1.bf16.msra.mxu0 0
      %1693 = vmatprep.subr.bf16.mxu0 0
      %1694 = vmatpush1.bf16.msra.mxu0 0
      %1695 = vmatprep.subr.bf16.mxu0 0
      %1696 = vmatpush1.bf16.msra.mxu0 0
      %1697 = vmatprep.subr.bf16.mxu0 0
      %1698 = vmatpush1.bf16.msra.mxu0 0
      %1699 = vmatprep.subr.bf16.mxu0 0
      %1700 = vmatpush1.bf16.msra.mxu0 0
      %1701 = vmatprep.subr.bf16.mxu0 0
      %1702 = vmatpush1.bf16.msra.mxu0 0
      %1703 = vmatprep.subr.bf16.mxu0 0
      %1704 = vmatpush1.bf16.msra.mxu0 0
      %1705 = vmatprep.subr.bf16.mxu0 0
      %1706 = vmatpush1.bf16.msra.mxu0 0
      %1707 = vmatprep.subr.bf16.mxu0 0
      %1708 = vmatpush1.bf16.msra.mxu0 0
      %1709 = vmatprep.subr.bf16.mxu0 0
      %1710 = vmatpush1.bf16.msra.mxu0 0
      %1711 = vmatprep.mubr.bf16.mxu0 0
      %1712 = vmatmul.mubr.bf16.gmra.mrb[0].mxu0 %v1677
      %v1713 = vpop.f32.mrb[0].mxu0
      %v1714 = vadd.f32 0.0, %v1713
      %v1715 = vpop.f32.mrb[0].mxu0
      %v1716 = vpop.f32.mrb[0].mxu0
      %v1717 = vadd.f32 0.0, %v1716
      %v1718 = vpop.f32.mrb[0].mxu0
      %1719 = vdwg.mxu0
      %v1722 = vunpack.c.l.b16 %v1640
      %v1723 = vunpack.c.l.b16 %v1641
      %v1724 = vpack.c.b16 %v1723, %v1722
      %v1727 = vsel %vm525, %v1623, 0
      %1729 = vmatprep.subr.bf16.mxu0 0
      %1730 = vmatpush1.bf16.msra.mxu0 %v1724
      %1731 = vmatprep.subr.bf16.mxu0 0
      %1732 = vmatpush1.bf16.msra.mxu0 0
      %1733 = vmatprep.subr.bf16.mxu0 0
      %1734 = vmatpush1.bf16.msra.mxu0 0
      %1735 = vmatprep.subr.bf16.mxu0 0
      %1736 = vmatpush1.bf16.msra.mxu0 0
      %1737 = vmatprep.subr.bf16.mxu0 0
      %1738 = vmatpush1.bf16.msra.mxu0 0
      %1739 = vmatprep.subr.bf16.mxu0 0
      %1740 = vmatpush1.bf16.msra.mxu0 0
      %1741 = vmatprep.subr.bf16.mxu0 0
      %1742 = vmatpush1.bf16.msra.mxu0 0
      %1743 = vmatprep.subr.bf16.mxu0 0
      %1744 = vmatpush1.bf16.msra.mxu0 0
      %1745 = vmatprep.subr.bf16.mxu0 0
      %1746 = vmatpush1.bf16.msra.mxu0 0
      %1747 = vmatprep.subr.bf16.mxu0 0
      %1748 = vmatpush1.bf16.msra.mxu0 0
      %1749 = vmatprep.subr.bf16.mxu0 0
      %1750 = vmatpush1.bf16.msra.mxu0 0
      %1751 = vmatprep.subr.bf16.mxu0 0
      %1752 = vmatpush1.bf16.msra.mxu0 0
      %1753 = vmatprep.subr.bf16.mxu0 0
      %1754 = vmatpush1.bf16.msra.mxu0 0
      %1755 = vmatprep.subr.bf16.mxu0 0
      %1756 = vmatpush1.bf16.msra.mxu0 0
      %1757 = vmatprep.subr.bf16.mxu0 0
      %1758 = vmatpush1.bf16.msra.mxu0 0
      %1759 = vmatprep.subr.bf16.mxu0 0
      %1760 = vmatpush1.bf16.msra.mxu0 0
      %1761 = vmatprep.mubr.bf16.mxu0 0
      %1762 = vmatmul.mubr.bf16.gmra.mrb[0].mxu0 %v1727
      %v1763 = vpop.f32.mrb[0].mxu0
      %v1764 = vadd.f32 0.0, %v1763
      %v1765 = vpop.f32.mrb[0].mxu0
      %v1766 = vpop.f32.mrb[0].mxu0
      %v1767 = vadd.f32 0.0, %v1766
      %v1768 = vpop.f32.mrb[0].mxu0
      %1769 = vdwg.mxu0
      %v1772 = vunpack.c.l.b16 %v1642
      %v1773 = vunpack.c.l.b16 %v1643
      %v1774 = vpack.c.b16 %v1773, %v1772
      %v1777 = vsel %vm525, %v1624, 0
      %1779 = vmatprep.subr.bf16.mxu0 0
      %1780 = vmatpush1.bf16.msra.mxu0 %v1774
      %1781 = vmatprep.subr.bf16.mxu0 0
      %1782 = vmatpush1.bf16.msra.mxu0 0
      %1783 = vmatprep.subr.bf16.mxu0 0
      %1784 = vmatpush1.bf16.msra.mxu0 0
      %1785 = vmatprep.subr.bf16.mxu0 0
      %1786 = vmatpush1.bf16.msra.mxu0 0
      %1787 = vmatprep.subr.bf16.mxu0 0
      %1788 = vmatpush1.bf16.msra.mxu0 0
      %1789 = vmatprep.subr.bf16.mxu0 0
      %1790 = vmatpush1.bf16.msra.mxu0 0
      %1791 = vmatprep.subr.bf16.mxu0 0
      %1792 = vmatpush1.bf16.msra.mxu0 0
      %1793 = vmatprep.subr.bf16.mxu0 0
      %1794 = vmatpush1.bf16.msra.mxu0 0
      %1795 = vmatprep.subr.bf16.mxu0 0
      %1796 = vmatpush1.bf16.msra.mxu0 0
      %1797 = vmatprep.subr.bf16.mxu0 0
      %1798 = vmatpush1.bf16.msra.mxu0 0
      %1799 = vmatprep.subr.bf16.mxu0 0
      %1800 = vmatpush1.bf16.msra.mxu0 0
      %1801 = vmatprep.subr.bf16.mxu0 0
      %1802 = vmatpush1.bf16.msra.mxu0 0
      %1803 = vmatprep.subr.bf16.mxu0 0
      %1804 = vmatpush1.bf16.msra.mxu0 0
      %1805 = vmatprep.subr.bf16.mxu0 0
      %1806 = vmatpush1.bf16.msra.mxu0 0
      %1807 = vmatprep.subr.bf16.mxu0 0
      %1808 = vmatpush1.bf16.msra.mxu0 0
      %1809 = vmatprep.subr.bf16.mxu0 0
      %1810 = vmatpush1.bf16.msra.mxu0 0
      %1811 = vmatprep.mubr.bf16.mxu0 0
      %1812 = vmatmul.mubr.bf16.gmra.mrb[0].mxu0 %v1777
      %v1813 = vpop.f32.mrb[0].mxu0
      %v1814 = vadd.f32 0.0, %v1813
      %v1815 = vpop.f32.mrb[0].mxu0
      %v1816 = vpop.f32.mrb[0].mxu0
      %v1817 = vadd.f32 0.0, %v1816
      %v1818 = vpop.f32.mrb[0].mxu0
      %1819 = vdwg.mxu0
      %v1822 = vunpack.c.l.b16 %v1644
      %v1823 = vunpack.c.l.b16 %v1645
      %v1824 = vpack.c.b16 %v1823, %v1822
      %v1827 = vsel %vm525, %v1625, 0
      %1829 = vmatprep.subr.bf16.mxu0 0
      %1830 = vmatpush1.bf16.msra.mxu0 %v1824
      %1831 = vmatprep.subr.bf16.mxu0 0
      %1832 = vmatpush1.bf16.msra.mxu0 0
      %1833 = vmatprep.subr.bf16.mxu0 0
      %1834 = vmatpush1.bf16.msra.mxu0 0
      %1835 = vmatprep.subr.bf16.mxu0 0
      %1836 = vmatpush1.bf16.msra.mxu0 0
      %1837 = vmatprep.subr.bf16.mxu0 0
      %1838 = vmatpush1.bf16.msra.mxu0 0
      %1839 = vmatprep.subr.bf16.mxu0 0
      %1840 = vmatpush1.bf16.msra.mxu0 0
      %1841 = vmatprep.subr.bf16.mxu0 0
      %1842 = vmatpush1.bf16.msra.mxu0 0
      %1843 = vmatprep.subr.bf16.mxu0 0
      %1844 = vmatpush1.bf16.msra.mxu0 0
      %1845 = vmatprep.subr.bf16.mxu0 0
      %1846 = vmatpush1.bf16.msra.mxu0 0
      %1847 = vmatprep.subr.bf16.mxu0 0
      %1848 = vmatpush1.bf16.msra.mxu0 0
      %1849 = vmatprep.subr.bf16.mxu0 0
      %1850 = vmatpush1.bf16.msra.mxu0 0
      %1851 = vmatprep.subr.bf16.mxu0 0
      %1852 = vmatpush1.bf16.msra.mxu0 0
      %1853 = vmatprep.subr.bf16.mxu0 0
      %1854 = vmatpush1.bf16.msra.mxu0 0
      %1855 = vmatprep.subr.bf16.mxu0 0
      %1856 = vmatpush1.bf16.msra.mxu0 0
      %1857 = vmatprep.subr.bf16.mxu0 0
      %1858 = vmatpush1.bf16.msra.mxu0 0
      %1859 = vmatprep.subr.bf16.mxu0 0
      %1860 = vmatpush1.bf16.msra.mxu0 0
      %1861 = vmatprep.mubr.bf16.mxu0 0
      %1862 = vmatmul.mubr.bf16.gmra.mrb[0].mxu0 %v1827
      %v1863 = vpop.f32.mrb[0].mxu0
      %v1864 = vadd.f32 0.0, %v1863
      %v1865 = vpop.f32.mrb[0].mxu0
      %v1866 = vpop.f32.mrb[0].mxu0
      %v1867 = vadd.f32 0.0, %v1866
      %v1868 = vpop.f32.mrb[0].mxu0
      %1869 = vdwg.mxu0
      %v1872 = vunpack.c.l.b16 %v1646
      %v1873 = vunpack.c.l.b16 %v1647
      %v1874 = vpack.c.b16 %v1873, %v1872
      %v1877 = vsel %vm525, %v1626, 0
      %1879 = vmatprep.subr.bf16.mxu0 0
      %1880 = vmatpush1.bf16.msra.mxu0 %v1874
      %1881 = vmatprep.subr.bf16.mxu0 0
      %1882 = vmatpush1.bf16.msra.mxu0 0
      %1883 = vmatprep.subr.bf16.mxu0 0
      %1884 = vmatpush1.bf16.msra.mxu0 0
      %1885 = vmatprep.subr.bf16.mxu0 0
      %1886 = vmatpush1.bf16.msra.mxu0 0
      %1887 = vmatprep.subr.bf16.mxu0 0
      %1888 = vmatpush1.bf16.msra.mxu0 0
      %1889 = vmatprep.subr.bf16.mxu0 0
      %1890 = vmatpush1.bf16.msra.mxu0 0
      %1891 = vmatprep.subr.bf16.mxu0 0
      %1892 = vmatpush1.bf16.msra.mxu0 0
      %1893 = vmatprep.subr.bf16.mxu0 0
      %1894 = vmatpush1.bf16.msra.mxu0 0
      %1895 = vmatprep.subr.bf16.mxu0 0
      %1896 = vmatpush1.bf16.msra.mxu0 0
      %1897 = vmatprep.subr.bf16.mxu0 0
      %1898 = vmatpush1.bf16.msra.mxu0 0
      %1899 = vmatprep.subr.bf16.mxu0 0
      %1900 = vmatpush1.bf16.msra.mxu0 0
      %1901 = vmatprep.subr.bf16.mxu0 0
      %1902 = vmatpush1.bf16.msra.mxu0 0
      %1903 = vmatprep.subr.bf16.mxu0 0
      %1904 = vmatpush1.bf16.msra.mxu0 0
      %1905 = vmatprep.subr.bf16.mxu0 0
      %1906 = vmatpush1.bf16.msra.mxu0 0
      %1907 = vmatprep.subr.bf16.mxu0 0
      %1908 = vmatpush1.bf16.msra.mxu0 0
      %1909 = vmatprep.subr.bf16.mxu0 0
      %1910 = vmatpush1.bf16.msra.mxu0 0
      %1911 = vmatprep.mubr.bf16.mxu0 0
      %1912 = vmatmul.mubr.bf16.gmra.mrb[0].mxu0 %v1877
      %v1913 = vpop.f32.mrb[0].mxu0
      %v1914 = vadd.f32 0.0, %v1913
      %v1915 = vpop.f32.mrb[0].mxu0
      %v1916 = vpop.f32.mrb[0].mxu0
      %v1917 = vadd.f32 0.0, %v1916
      %v1918 = vpop.f32.mrb[0].mxu0
      %1919 = vdwg.mxu0
      %v1922 = vunpack.c.l.b16 %v1648
      %v1923 = vunpack.c.l.b16 %v1649
      %v1924 = vpack.c.b16 %v1923, %v1922
      %v1927 = vsel %vm525, %v1627, 0
      %1929 = vmatprep.subr.bf16.mxu0 0
      %1930 = vmatpush1.bf16.msra.mxu0 %v1924
      %1931 = vmatprep.subr.bf16.mxu0 0
      %1932 = vmatpush1.bf16.msra.mxu0 0
      %1933 = vmatprep.subr.bf16.mxu0 0
      %1934 = vmatpush1.bf16.msra.mxu0 0
      %1935 = vmatprep.subr.bf16.mxu0 0
      %1936 = vmatpush1.bf16.msra.mxu0 0
      %1937 = vmatprep.subr.bf16.mxu0 0
      %1938 = vmatpush1.bf16.msra.mxu0 0
      %1939 = vmatprep.subr.bf16.mxu0 0
      %1940 = vmatpush1.bf16.msra.mxu0 0
      %1941 = vmatprep.subr.bf16.mxu0 0
      %1942 = vmatpush1.bf16.msra.mxu0 0
      %1943 = vmatprep.subr.bf16.mxu0 0
      %1944 = vmatpush1.bf16.msra.mxu0 0
      %1945 = vmatprep.subr.bf16.mxu0 0
      %1946 = vmatpush1.bf16.msra.mxu0 0
      %1947 = vmatprep.subr.bf16.mxu0 0
      %1948 = vmatpush1.bf16.msra.mxu0 0
      %1949 = vmatprep.subr.bf16.mxu0 0
      %1950 = vmatpush1.bf16.msra.mxu0 0
      %1951 = vmatprep.subr.bf16.mxu0 0
      %1952 = vmatpush1.bf16.msra.mxu0 0
      %1953 = vmatprep.subr.bf16.mxu0 0
      %1954 = vmatpush1.bf16.msra.mxu0 0
      %1955 = vmatprep.subr.bf16.mxu0 0
      %1956 = vmatpush1.bf16.msra.mxu0 0
      %1957 = vmatprep.subr.bf16.mxu0 0
      %1958 = vmatpush1.bf16.msra.mxu0 0
      %1959 = vmatprep.subr.bf16.mxu0 0
      %1960 = vmatpush1.bf16.msra.mxu0 0
      %1961 = vmatprep.mubr.bf16.mxu0 0
      %1962 = vmatmul.mubr.bf16.gmra.mrb[0].mxu0 %v1927
      %v1963 = vpop.f32.mrb[0].mxu0
      %v1964 = vadd.f32 0.0, %v1963
      %v1965 = vpop.f32.mrb[0].mxu0
      %v1966 = vpop.f32.mrb[0].mxu0
      %v1967 = vadd.f32 0.0, %v1966
      %v1968 = vpop.f32.mrb[0].mxu0
      %1969 = vdwg.mxu0
      %v1972 = vunpack.c.l.b16 %v1650
      %v1973 = vunpack.c.l.b16 %v1651
      %v1974 = vpack.c.b16 %v1973, %v1972
      %v1977 = vsel %vm525, %v1628, 0
      %1979 = vmatprep.subr.bf16.mxu0 0
      %1980 = vmatpush1.bf16.msra.mxu0 %v1974
      %1981 = vmatprep.subr.bf16.mxu0 0
      %1982 = vmatpush1.bf16.msra.mxu0 0
      %1983 = vmatprep.subr.bf16.mxu0 0
      %1984 = vmatpush1.bf16.msra.mxu0 0
      %1985 = vmatprep.subr.bf16.mxu0 0
      %1986 = vmatpush1.bf16.msra.mxu0 0
      %1987 = vmatprep.subr.bf16.mxu0 0
      %1988 = vmatpush1.bf16.msra.mxu0 0
      %1989 = vmatprep.subr.bf16.mxu0 0
      %1990 = vmatpush1.bf16.msra.mxu0 0
      %1991 = vmatprep.subr.bf16.mxu0 0
      %1992 = vmatpush1.bf16.msra.mxu0 0
      %1993 = vmatprep.subr.bf16.mxu0 0
      %1994 = vmatpush1.bf16.msra.mxu0 0
      %1995 = vmatprep.subr.bf16.mxu0 0
      %1996 = vmatpush1.bf16.msra.mxu0 0
      %1997 = vmatprep.subr.bf16.mxu0 0
      %1998 = vmatpush1.bf16.msra.mxu0 0
      %1999 = vmatprep.subr.bf16.mxu0 0
      %2000 = vmatpush1.bf16.msra.mxu0 0
      %2001 = vmatprep.subr.bf16.mxu0 0
      %2002 = vmatpush1.bf16.msra.mxu0 0
      %2003 = vmatprep.subr.bf16.mxu0 0
      %2004 = vmatpush1.bf16.msra.mxu0 0
      %2005 = vmatprep.subr.bf16.mxu0 0
      %2006 = vmatpush1.bf16.msra.mxu0 0
      %2007 = vmatprep.subr.bf16.mxu0 0
      %2008 = vmatpush1.bf16.msra.mxu0 0
      %2009 = vmatprep.subr.bf16.mxu0 0
      %2010 = vmatpush1.bf16.msra.mxu0 0
      %2011 = vmatprep.mubr.bf16.mxu0 0
      %2012 = vmatmul.mubr.bf16.gmra.mrb[0].mxu0 %v1977
      %v2013 = vpop.f32.mrb[0].mxu0
      %v2014 = vadd.f32 0.0, %v2013
      %v2015 = vpop.f32.mrb[0].mxu0
      %v2016 = vpop.f32.mrb[0].mxu0
      %v2017 = vadd.f32 0.0, %v2016
      %v2018 = vpop.f32.mrb[0].mxu0
      %2019 = vdwg.mxu0
      %v2022 = vunpack.c.l.b16 %v1652
      %v2023 = vunpack.c.l.b16 %v1653
      %v2024 = vpack.c.b16 %v2023, %v2022
      %v2027 = vsel %vm525, %v1629, 0
      %2029 = vmatprep.subr.bf16.mxu0 0
      %2030 = vmatpush1.bf16.msra.mxu0 %v2024
      %2031 = vmatprep.subr.bf16.mxu0 0
      %2032 = vmatpush1.bf16.msra.mxu0 0
      %2033 = vmatprep.subr.bf16.mxu0 0
      %2034 = vmatpush1.bf16.msra.mxu0 0
      %2035 = vmatprep.subr.bf16.mxu0 0
      %2036 = vmatpush1.bf16.msra.mxu0 0
      %2037 = vmatprep.subr.bf16.mxu0 0
      %2038 = vmatpush1.bf16.msra.mxu0 0
      %2039 = vmatprep.subr.bf16.mxu0 0
      %2040 = vmatpush1.bf16.msra.mxu0 0
      %2041 = vmatprep.subr.bf16.mxu0 0
      %2042 = vmatpush1.bf16.msra.mxu0 0
      %2043 = vmatprep.subr.bf16.mxu0 0
      %2044 = vmatpush1.bf16.msra.mxu0 0
      %2045 = vmatprep.subr.bf16.mxu0 0
      %2046 = vmatpush1.bf16.msra.mxu0 0
      %2047 = vmatprep.subr.bf16.mxu0 0
      %2048 = vmatpush1.bf16.msra.mxu0 0
      %2049 = vmatprep.subr.bf16.mxu0 0
      %2050 = vmatpush1.bf16.msra.mxu0 0
      %2051 = vmatprep.subr.bf16.mxu0 0
      %2052 = vmatpush1.bf16.msra.mxu0 0
      %2053 = vmatprep.subr.bf16.mxu0 0
      %2054 = vmatpush1.bf16.msra.mxu0 0
      %2055 = vmatprep.subr.bf16.mxu0 0
      %2056 = vmatpush1.bf16.msra.mxu0 0
      %2057 = vmatprep.subr.bf16.mxu0 0
      %2058 = vmatpush1.bf16.msra.mxu0 0
      %2059 = vmatprep.subr.bf16.mxu0 0
      %2060 = vmatpush1.bf16.msra.mxu0 0
      %2061 = vmatprep.mubr.bf16.mxu0 0
      %2062 = vmatmul.mubr.bf16.gmra.mrb[0].mxu0 %v2027
      %v2063 = vpop.f32.mrb[0].mxu0
      %v2064 = vadd.f32 0.0, %v2063
      %v2065 = vpop.f32.mrb[0].mxu0
      %v2066 = vpop.f32.mrb[0].mxu0
      %v2067 = vadd.f32 0.0, %v2066
      %v2068 = vpop.f32.mrb[0].mxu0
      %2069 = vdwg.mxu0
      %v2072 = vunpack.c.l.b16 %v1654
      %v2073 = vunpack.c.l.b16 %v1655
      %v2074 = vpack.c.b16 %v2073, %v2072
      %v2077 = vsel %vm525, %v1630, 0
      %2079 = vmatprep.subr.bf16.mxu0 0
      %2080 = vmatpush1.bf16.msra.mxu0 %v2074
      %2081 = vmatprep.subr.bf16.mxu0 0
      %2082 = vmatpush1.bf16.msra.mxu0 0
      %2083 = vmatprep.subr.bf16.mxu0 0
      %2084 = vmatpush1.bf16.msra.mxu0 0
      %2085 = vmatprep.subr.bf16.mxu0 0
      %2086 = vmatpush1.bf16.msra.mxu0 0
      %2087 = vmatprep.subr.bf16.mxu0 0
      %2088 = vmatpush1.bf16.msra.mxu0 0
      %2089 = vmatprep.subr.bf16.mxu0 0
      %2090 = vmatpush1.bf16.msra.mxu0 0
      %2091 = vmatprep.subr.bf16.mxu0 0
      %2092 = vmatpush1.bf16.msra.mxu0 0
      %2093 = vmatprep.subr.bf16.mxu0 0
      %2094 = vmatpush1.bf16.msra.mxu0 0
      %2095 = vmatprep.subr.bf16.mxu0 0
      %2096 = vmatpush1.bf16.msra.mxu0 0
      %2097 = vmatprep.subr.bf16.mxu0 0
      %2098 = vmatpush1.bf16.msra.mxu0 0
      %2099 = vmatprep.subr.bf16.mxu0 0
      %2100 = vmatpush1.bf16.msra.mxu0 0
      %2101 = vmatprep.subr.bf16.mxu0 0
      %2102 = vmatpush1.bf16.msra.mxu0 0
      %2103 = vmatprep.subr.bf16.mxu0 0
      %2104 = vmatpush1.bf16.msra.mxu0 0
      %2105 = vmatprep.subr.bf16.mxu0 0
      %2106 = vmatpush1.bf16.msra.mxu0 0
      %2107 = vmatprep.subr.bf16.mxu0 0
      %2108 = vmatpush1.bf16.msra.mxu0 0
      %2109 = vmatprep.subr.bf16.mxu0 0
      %2110 = vmatpush1.bf16.msra.mxu0 0
      %2111 = vmatprep.mubr.bf16.mxu0 0
      %2112 = vmatmul.mubr.bf16.gmra.mrb[0].mxu0 %v2077
      %v2113 = vpop.f32.mrb[0].mxu0
      %v2114 = vadd.f32 0.0, %v2113
      %v2115 = vpop.f32.mrb[0].mxu0
      %v2116 = vpop.f32.mrb[0].mxu0
      %v2117 = vadd.f32 0.0, %v2116
      %v2118 = vpop.f32.mrb[0].mxu0
      %2119 = vdwg.mxu0
      %v2122 = vunpack.c.l.b16 %v1656
      %v2123 = vunpack.c.l.b16 %v1657
      %v2124 = vpack.c.b16 %v2123, %v2122
      %v2127 = vsel %vm525, %v1631, 0
      %2129 = vmatprep.subr.bf16.mxu0 0
      %2130 = vmatpush1.bf16.msra.mxu0 %v2124
      %2131 = vmatprep.subr.bf16.mxu0 0
      %2132 = vmatpush1.bf16.msra.mxu0 0
      %2133 = vmatprep.subr.bf16.mxu0 0
      %2134 = vmatpush1.bf16.msra.mxu0 0
      %2135 = vmatprep.subr.bf16.mxu0 0
      %2136 = vmatpush1.bf16.msra.mxu0 0
      %2137 = vmatprep.subr.bf16.mxu0 0
      %2138 = vmatpush1.bf16.msra.mxu0 0
      %2139 = vmatprep.subr.bf16.mxu0 0
      %2140 = vmatpush1.bf16.msra.mxu0 0
      %2141 = vmatprep.subr.bf16.mxu0 0
      %2142 = vmatpush1.bf16.msra.mxu0 0
      %2143 = vmatprep.subr.bf16.mxu0 0
      %2144 = vmatpush1.bf16.msra.mxu0 0
      %2145 = vmatprep.subr.bf16.mxu0 0
      %2146 = vmatpush1.bf16.msra.mxu0 0
      %2147 = vmatprep.subr.bf16.mxu0 0
      %2148 = vmatpush1.bf16.msra.mxu0 0
      %2149 = vmatprep.subr.bf16.mxu0 0
      %2150 = vmatpush1.bf16.msra.mxu0 0
      %2151 = vmatprep.subr.bf16.mxu0 0
      %2152 = vmatpush1.bf16.msra.mxu0 0
      %2153 = vmatprep.subr.bf16.mxu0 0
      %2154 = vmatpush1.bf16.msra.mxu0 0
      %2155 = vmatprep.subr.bf16.mxu0 0
      %2156 = vmatpush1.bf16.msra.mxu0 0
      %2157 = vmatprep.subr.bf16.mxu0 0
      %2158 = vmatpush1.bf16.msra.mxu0 0
      %2159 = vmatprep.subr.bf16.mxu0 0
      %2160 = vmatpush1.bf16.msra.mxu0 0
      %2161 = vmatprep.mubr.bf16.mxu0 0
      %2162 = vmatmul.mubr.bf16.gmra.mrb[0].mxu0 %v2127
      %v2163 = vpop.f32.mrb[0].mxu0
      %v2164 = vadd.f32 0.0, %v2163
      %v2165 = vpop.f32.mrb[0].mxu0
      %v2166 = vpop.f32.mrb[0].mxu0
      %v2167 = vadd.f32 0.0, %v2166
      %v2168 = vpop.f32.mrb[0].mxu0
      %2169 = vdwg.mxu0
      %v2172 = vunpack.c.l.b16 %v1658
      %v2173 = vunpack.c.l.b16 %v1659
      %v2174 = vpack.c.b16 %v2173, %v2172
      %v2177 = vsel %vm525, %v1632, 0
      %2179 = vmatprep.subr.bf16.mxu0 0
      %2180 = vmatpush1.bf16.msra.mxu0 %v2174
      %2181 = vmatprep.subr.bf16.mxu0 0
      %2182 = vmatpush1.bf16.msra.mxu0 0
      %2183 = vmatprep.subr.bf16.mxu0 0
      %2184 = vmatpush1.bf16.msra.mxu0 0
      %2185 = vmatprep.subr.bf16.mxu0 0
      %2186 = vmatpush1.bf16.msra.mxu0 0
      %2187 = vmatprep.subr.bf16.mxu0 0
      %2188 = vmatpush1.bf16.msra.mxu0 0
      %2189 = vmatprep.subr.bf16.mxu0 0
      %2190 = vmatpush1.bf16.msra.mxu0 0
      %2191 = vmatprep.subr.bf16.mxu0 0
      %2192 = vmatpush1.bf16.msra.mxu0 0
      %2193 = vmatprep.subr.bf16.mxu0 0
      %2194 = vmatpush1.bf16.msra.mxu0 0
      %2195 = vmatprep.subr.bf16.mxu0 0
      %2196 = vmatpush1.bf16.msra.mxu0 0
      %2197 = vmatprep.subr.bf16.mxu0 0
      %2198 = vmatpush1.bf16.msra.mxu0 0
      %2199 = vmatprep.subr.bf16.mxu0 0
      %2200 = vmatpush1.bf16.msra.mxu0 0
      %2201 = vmatprep.subr.bf16.mxu0 0
      %2202 = vmatpush1.bf16.msra.mxu0 0
      %2203 = vmatprep.subr.bf16.mxu0 0
      %2204 = vmatpush1.bf16.msra.mxu0 0
      %2205 = vmatprep.subr.bf16.mxu0 0
      %2206 = vmatpush1.bf16.msra.mxu0 0
      %2207 = vmatprep.subr.bf16.mxu0 0
      %2208 = vmatpush1.bf16.msra.mxu0 0
      %2209 = vmatprep.subr.bf16.mxu0 0
      %2210 = vmatpush1.bf16.msra.mxu0 0
      %2211 = vmatprep.mubr.bf16.mxu0 0
      %2212 = vmatmul.mubr.bf16.gmra.mrb[0].mxu0 %v2177
      %v2213 = vpop.f32.mrb[0].mxu0
      %v2214 = vadd.f32 0.0, %v2213
      %v2215 = vpop.f32.mrb[0].mxu0
      %v2216 = vpop.f32.mrb[0].mxu0
      %v2217 = vadd.f32 0.0, %v2216
      %v2218 = vpop.f32.mrb[0].mxu0
      %2219 = vdwg.mxu0
      %v2222 = vunpack.c.l.b16 %v1660
      %v2223 = vunpack.c.l.b16 %v1661
      %v2224 = vpack.c.b16 %v2223, %v2222
      %v2227 = vsel %vm525, %v1633, 0
      %2229 = vmatprep.subr.bf16.mxu0 0
      %2230 = vmatpush1.bf16.msra.mxu0 %v2224
      %2231 = vmatprep.subr.bf16.mxu0 0
      %2232 = vmatpush1.bf16.msra.mxu0 0
      %2233 = vmatprep.subr.bf16.mxu0 0
      %2234 = vmatpush1.bf16.msra.mxu0 0
      %2235 = vmatprep.subr.bf16.mxu0 0
      %2236 = vmatpush1.bf16.msra.mxu0 0
      %2237 = vmatprep.subr.bf16.mxu0 0
      %2238 = vmatpush1.bf16.msra.mxu0 0
      %2239 = vmatprep.subr.bf16.mxu0 0
      %2240 = vmatpush1.bf16.msra.mxu0 0
      %2241 = vmatprep.subr.bf16.mxu0 0
      %2242 = vmatpush1.bf16.msra.mxu0 0
      %2243 = vmatprep.subr.bf16.mxu0 0
      %2244 = vmatpush1.bf16.msra.mxu0 0
      %2245 = vmatprep.subr.bf16.mxu0 0
      %2246 = vmatpush1.bf16.msra.mxu0 0
      %2247 = vmatprep.subr.bf16.mxu0 0
      %2248 = vmatpush1.bf16.msra.mxu0 0
      %2249 = vmatprep.subr.bf16.mxu0 0
      %2250 = vmatpush1.bf16.msra.mxu0 0
      %2251 = vmatprep.subr.bf16.mxu0 0
      %2252 = vmatpush1.bf16.msra.mxu0 0
      %2253 = vmatprep.subr.bf16.mxu0 0
      %2254 = vmatpush1.bf16.msra.mxu0 0
      %2255 = vmatprep.subr.bf16.mxu0 0
      %2256 = vmatpush1.bf16.msra.mxu0 0
      %2257 = vmatprep.subr.bf16.mxu0 0
      %2258 = vmatpush1.bf16.msra.mxu0 0
      %2259 = vmatprep.subr.bf16.mxu0 0
      %2260 = vmatpush1.bf16.msra.mxu0 0
      %2261 = vmatprep.mubr.bf16.mxu0 0
      %2262 = vmatmul.mubr.bf16.gmra.mrb[0].mxu0 %v2227
      %v2263 = vpop.f32.mrb[0].mxu0
      %v2264 = vadd.f32 0.0, %v2263
      %v2265 = vpop.f32.mrb[0].mxu0
      %v2266 = vpop.f32.mrb[0].mxu0
      %v2267 = vadd.f32 0.0, %v2266
      %v2268 = vpop.f32.mrb[0].mxu0
      %2269 = vdwg.mxu0
      %v2272 = vunpack.c.l.b16 %v1662
      %v2273 = vunpack.c.l.b16 %v1663
      %v2274 = vpack.c.b16 %v2273, %v2272
      %v2277 = vsel %vm525, %v1634, 0
      %2279 = vmatprep.subr.bf16.mxu0 0
      %2280 = vmatpush1.bf16.msra.mxu0 %v2274
      %2281 = vmatprep.subr.bf16.mxu0 0
      %2282 = vmatpush1.bf16.msra.mxu0 0
      %2283 = vmatprep.subr.bf16.mxu0 0
      %2284 = vmatpush1.bf16.msra.mxu0 0
      %2285 = vmatprep.subr.bf16.mxu0 0
      %2286 = vmatpush1.bf16.msra.mxu0 0
      %2287 = vmatprep.subr.bf16.mxu0 0
      %2288 = vmatpush1.bf16.msra.mxu0 0
      %2289 = vmatprep.subr.bf16.mxu0 0
      %2290 = vmatpush1.bf16.msra.mxu0 0
      %2291 = vmatprep.subr.bf16.mxu0 0
      %2292 = vmatpush1.bf16.msra.mxu0 0
      %2293 = vmatprep.subr.bf16.mxu0 0
      %2294 = vmatpush1.bf16.msra.mxu0 0
      %2295 = vmatprep.subr.bf16.mxu0 0
      %2296 = vmatpush1.bf16.msra.mxu0 0
      %2297 = vmatprep.subr.bf16.mxu0 0
      %2298 = vmatpush1.bf16.msra.mxu0 0
      %2299 = vmatprep.subr.bf16.mxu0 0
      %2300 = vmatpush1.bf16.msra.mxu0 0
      %2301 = vmatprep.subr.bf16.mxu0 0
      %2302 = vmatpush1.bf16.msra.mxu0 0
      %2303 = vmatprep.subr.bf16.mxu0 0
      %2304 = vmatpush1.bf16.msra.mxu0 0
      %2305 = vmatprep.subr.bf16.mxu0 0
      %2306 = vmatpush1.bf16.msra.mxu0 0
      %2307 = vmatprep.subr.bf16.mxu0 0
      %2308 = vmatpush1.bf16.msra.mxu0 0
      %2309 = vmatprep.subr.bf16.mxu0 0
      %2310 = vmatpush1.bf16.msra.mxu0 0
      %2311 = vmatprep.mubr.bf16.mxu0 0
      %2312 = vmatmul.mubr.bf16.gmra.mrb[0].mxu0 %v2277
      %v2313 = vpop.f32.mrb[0].mxu0
      %v2314 = vadd.f32 0.0, %v2313
      %v2315 = vpop.f32.mrb[0].mxu0
      %v2316 = vpop.f32.mrb[0].mxu0
      %v2317 = vadd.f32 0.0, %v2316
      %v2318 = vpop.f32.mrb[0].mxu0
      %2319 = vdwg.mxu0
      %v2322 = vunpack.c.l.b16 %v1664
      %v2323 = vunpack.c.l.b16 %v1665
      %v2324 = vpack.c.b16 %v2323, %v2322
      %v2327 = vsel %vm525, %v1635, 0
      %2329 = vmatprep.subr.bf16.mxu0 0
      %2330 = vmatpush1.bf16.msra.mxu0 %v2324
      %2331 = vmatprep.subr.bf16.mxu0 0
      %2332 = vmatpush1.bf16.msra.mxu0 0
      %2333 = vmatprep.subr.bf16.mxu0 0
      %2334 = vmatpush1.bf16.msra.mxu0 0
      %2335 = vmatprep.subr.bf16.mxu0 0
      %2336 = vmatpush1.bf16.msra.mxu0 0
      %2337 = vmatprep.subr.bf16.mxu0 0
      %2338 = vmatpush1.bf16.msra.mxu0 0
      %2339 = vmatprep.subr.bf16.mxu0 0
      %2340 = vmatpush1.bf16.msra.mxu0 0
      %2341 = vmatprep.subr.bf16.mxu0 0
      %2342 = vmatpush1.bf16.msra.mxu0 0
      %2343 = vmatprep.subr.bf16.mxu0 0
      %2344 = vmatpush1.bf16.msra.mxu0 0
      %2345 = vmatprep.subr.bf16.mxu0 0
      %2346 = vmatpush1.bf16.msra.mxu0 0
      %2347 = vmatprep.subr.bf16.mxu0 0
      %2348 = vmatpush1.bf16.msra.mxu0 0
      %2349 = vmatprep.subr.bf16.mxu0 0
      %2350 = vmatpush1.bf16.msra.mxu0 0
      %2351 = vmatprep.subr.bf16.mxu0 0
      %2352 = vmatpush1.bf16.msra.mxu0 0
      %2353 = vmatprep.subr.bf16.mxu0 0
      %2354 = vmatpush1.bf16.msra.mxu0 0
      %2355 = vmatprep.subr.bf16.mxu0 0
      %2356 = vmatpush1.bf16.msra.mxu0 0
      %2357 = vmatprep.subr.bf16.mxu0 0
      %2358 = vmatpush1.bf16.msra.mxu0 0
      %2359 = vmatprep.subr.bf16.mxu0 0
      %2360 = vmatpush1.bf16.msra.mxu0 0
      %2361 = vmatprep.mubr.bf16.mxu0 0
      %2362 = vmatmul.mubr.bf16.gmra.mrb[0].mxu0 %v2327
      %v2363 = vpop.f32.mrb[0].mxu0
      %v2364 = vadd.f32 0.0, %v2363
      %v2365 = vpop.f32.mrb[0].mxu0
      %v2366 = vpop.f32.mrb[0].mxu0
      %v2367 = vadd.f32 0.0, %v2366
      %v2368 = vpop.f32.mrb[0].mxu0
      %2369 = vdwg.mxu0
      %v2372 = vunpack.c.l.b16 %v1666
      %v2373 = vunpack.c.l.b16 %v1667
      %v2374 = vpack.c.b16 %v2373, %v2372
      %v2377 = vsel %vm525, %v1636, 0
      %2379 = vmatprep.subr.bf16.mxu0 0
      %2380 = vmatpush1.bf16.msra.mxu0 %v2374
      %2381 = vmatprep.subr.bf16.mxu0 0
      %2382 = vmatpush1.bf16.msra.mxu0 0
      %2383 = vmatprep.subr.bf16.mxu0 0
      %2384 = vmatpush1.bf16.msra.mxu0 0
      %2385 = vmatprep.subr.bf16.mxu0 0
      %2386 = vmatpush1.bf16.msra.mxu0 0
      %2387 = vmatprep.subr.bf16.mxu0 0
      %2388 = vmatpush1.bf16.msra.mxu0 0
      %2389 = vmatprep.subr.bf16.mxu0 0
      %2390 = vmatpush1.bf16.msra.mxu0 0
      %2391 = vmatprep.subr.bf16.mxu0 0
      %2392 = vmatpush1.bf16.msra.mxu0 0
      %2393 = vmatprep.subr.bf16.mxu0 0
      %2394 = vmatpush1.bf16.msra.mxu0 0
      %2395 = vmatprep.subr.bf16.mxu0 0
      %2396 = vmatpush1.bf16.msra.mxu0 0
      %2397 = vmatprep.subr.bf16.mxu0 0
      %2398 = vmatpush1.bf16.msra.mxu0 0
      %2399 = vmatprep.subr.bf16.mxu0 0
      %2400 = vmatpush1.bf16.msra.mxu0 0
      %2401 = vmatprep.subr.bf16.mxu0 0
      %2402 = vmatpush1.bf16.msra.mxu0 0
      %2403 = vmatprep.subr.bf16.mxu0 0
      %2404 = vmatpush1.bf16.msra.mxu0 0
      %2405 = vmatprep.subr.bf16.mxu0 0
      %2406 = vmatpush1.bf16.msra.mxu0 0
      %2407 = vmatprep.subr.bf16.mxu0 0
      %2408 = vmatpush1.bf16.msra.mxu0 0
      %2409 = vmatprep.subr.bf16.mxu0 0
      %2410 = vmatpush1.bf16.msra.mxu0 0
      %2411 = vmatprep.mubr.bf16.mxu0 0
      %2412 = vmatmul.mubr.bf16.gmra.mrb[0].mxu0 %v2377
      %v2413 = vpop.f32.mrb[0].mxu0
      %v2414 = vadd.f32 0.0, %v2413
      %v2415 = vpop.f32.mrb[0].mxu0
      %v2416 = vpop.f32.mrb[0].mxu0
      %v2417 = vadd.f32 0.0, %v2416
      %v2418 = vpop.f32.mrb[0].mxu0
      %2419 = vdwg.mxu0
      %v2422 = vunpack.c.l.b16 %v1668
      %v2423 = vunpack.c.l.b16 %v1669
      %v2424 = vpack.c.b16 %v2423, %v2422
      %v2427 = vsel %vm525, %v1637, 0
      %2429 = vmatprep.subr.bf16.mxu0 0
      %2430 = vmatpush1.bf16.msra.mxu0 %v2424
      %2431 = vmatprep.subr.bf16.mxu0 0
      %2432 = vmatpush1.bf16.msra.mxu0 0
      %2433 = vmatprep.subr.bf16.mxu0 0
      %2434 = vmatpush1.bf16.msra.mxu0 0
      %2435 = vmatprep.subr.bf16.mxu0 0
      %2436 = vmatpush1.bf16.msra.mxu0 0
      %2437 = vmatprep.subr.bf16.mxu0 0
      %2438 = vmatpush1.bf16.msra.mxu0 0
      %2439 = vmatprep.subr.bf16.mxu0 0
      %2440 = vmatpush1.bf16.msra.mxu0 0
      %2441 = vmatprep.subr.bf16.mxu0 0
      %2442 = vmatpush1.bf16.msra.mxu0 0
      %2443 = vmatprep.subr.bf16.mxu0 0
      %2444 = vmatpush1.bf16.msra.mxu0 0
      %2445 = vmatprep.subr.bf16.mxu0 0
      %2446 = vmatpush1.bf16.msra.mxu0 0
      %2447 = vmatprep.subr.bf16.mxu0 0
      %2448 = vmatpush1.bf16.msra.mxu0 0
      %2449 = vmatprep.subr.bf16.mxu0 0
      %2450 = vmatpush1.bf16.msra.mxu0 0
      %2451 = vmatprep.subr.bf16.mxu0 0
      %2452 = vmatpush1.bf16.msra.mxu0 0
      %2453 = vmatprep.subr.bf16.mxu0 0
      %2454 = vmatpush1.bf16.msra.mxu0 0
      %2455 = vmatprep.subr.bf16.mxu0 0
      %2456 = vmatpush1.bf16.msra.mxu0 0
      %2457 = vmatprep.subr.bf16.mxu0 0
      %2458 = vmatpush1.bf16.msra.mxu0 0
      %2459 = vmatprep.subr.bf16.mxu0 0
      %2460 = vmatpush1.bf16.msra.mxu0 0
      %2461 = vmatprep.mubr.bf16.mxu0 0
      %2462 = vmatmul.mubr.bf16.gmra.mrb[0].mxu0 %v2427
      %v2463 = vpop.f32.mrb[0].mxu0
      %v2464 = vadd.f32 0.0, %v2463
      %v2465 = vpop.f32.mrb[0].mxu0
      %v2466 = vpop.f32.mrb[0].mxu0
      %v2467 = vadd.f32 0.0, %v2466
      %v2468 = vpop.f32.mrb[0].mxu0
      %2469 = vdwg.mxu0
      %v2470 = vsel %vm868, %v1714, 0.0
      %v2471 = vsel %vm868, %v1764, 0.0
      %v2472 = vadd.f32 %v2470, %v2471
      %v2473 = vsel %vm868, %v1814, 0.0
      %v2474 = vadd.f32 %v2472, %v2473
      %v2475 = vsel %vm868, %v1864, 0.0
      %v2476 = vadd.f32 %v2474, %v2475
      %v2477 = vsel %vm868, %v1914, 0.0
      %v2478 = vadd.f32 %v2476, %v2477
      %v2479 = vsel %vm868, %v1964, 0.0
      %v2480 = vadd.f32 %v2478, %v2479
      %v2481 = vsel %vm868, %v2014, 0.0
      %v2482 = vadd.f32 %v2480, %v2481
      %v2483 = vsel %vm868, %v2064, 0.0
      %v2484 = vadd.f32 %v2482, %v2483
      %v2485 = vsel %vm868, %v2114, 0.0
      %v2486 = vadd.f32 %v2484, %v2485
      %v2487 = vsel %vm868, %v2164, 0.0
      %v2488 = vadd.f32 %v2486, %v2487
      %v2489 = vsel %vm868, %v2214, 0.0
      %v2490 = vadd.f32 %v2488, %v2489
      %v2491 = vsel %vm868, %v2264, 0.0
      %v2492 = vadd.f32 %v2490, %v2491
      %v2493 = vsel %vm868, %v2314, 0.0
      %v2494 = vadd.f32 %v2492, %v2493
      %v2495 = vsel %vm868, %v2364, 0.0
      %v2496 = vadd.f32 %v2494, %v2495
      %v2497 = vsel %vm868, %v2414, 0.0
      %v2498 = vadd.f32 %v2496, %v2497
      %v2499 = vsel %vm868, %v2464, 0.0
      %v2500 = vadd.f32 %v2498, %v2499
      %v2501 = vsel %vm868, %v1717, 0.0
      %v2502 = vsel %vm868, %v1767, 0.0
      %v2503 = vadd.f32 %v2501, %v2502
      %v2504 = vsel %vm868, %v1817, 0.0
      %v2505 = vadd.f32 %v2503, %v2504
      %v2506 = vsel %vm868, %v1867, 0.0
      %v2507 = vadd.f32 %v2505, %v2506
      %v2508 = vsel %vm868, %v1917, 0.0
      %v2509 = vadd.f32 %v2507, %v2508
      %v2510 = vsel %vm868, %v1967, 0.0
      %v2511 = vadd.f32 %v2509, %v2510
      %v2512 = vsel %vm868, %v2017, 0.0
      %v2513 = vadd.f32 %v2511, %v2512
      %v2514 = vsel %vm868, %v2067, 0.0
      %v2515 = vadd.f32 %v2513, %v2514
      %v2516 = vsel %vm868, %v2117, 0.0
      %v2517 = vadd.f32 %v2515, %v2516
      %v2518 = vsel %vm868, %v2167, 0.0
      %v2519 = vadd.f32 %v2517, %v2518
      %v2520 = vsel %vm868, %v2217, 0.0
      %v2521 = vadd.f32 %v2519, %v2520
      %v2522 = vsel %vm868, %v2267, 0.0
      %v2523 = vadd.f32 %v2521, %v2522
      %v2524 = vsel %vm868, %v2317, 0.0
      %v2525 = vadd.f32 %v2523, %v2524
      %v2526 = vsel %vm868, %v2367, 0.0
      %v2527 = vadd.f32 %v2525, %v2526
      %v2528 = vsel %vm868, %v2417, 0.0
      %v2529 = vadd.f32 %v2527, %v2528
      %v2530 = vsel %vm868, %v2467, 0.0
      %v2531 = vadd.f32 %v2529, %v2530
      %v2532 = vlaneseq
      %v2533 = vshrl.u32 %v2532, 7
      %v2534 = vsub.s32 3, %v2533
      %v2535 = vrot.slane %v382, %v2534
      %v2536 = vadd.f32 %v2500, %v2535
      %v2537 = vadd.f32 %v2531, %v2535
      %v2538 = vsel %vm868, %v2536, 0.0
      %v2539 = vrot.slane %v2538, 4
      %v2540 = vadd.f32 %v2538, %v2539
      %v2541 = vrot.slane %v2540, 2
      %v2542 = vadd.f32 %v2540, %v2541
      %v2543 = vrot.slane %v2542, 1
      %v2544 = vadd.f32 %v2542, %v2543
      %v2545 = vsel %vm868, %v2537, 0.0
      %v2546 = vrot.slane %v2545, 4
      %v2547 = vadd.f32 %v2545, %v2546
      %v2548 = vrot.slane %v2547, 2
      %v2549 = vadd.f32 %v2547, %v2548
      %v2550 = vrot.slane %v2549, 1
      %v2551 = vadd.f32 %v2549, %v2550
      %v2552 = vmul.f32 %v2544, 0.125
      %v2553 = vmul.f32 %v2551, 0.125
      %v2554 = vmul.f32 %v2536, %v2536
      %v2555 = vmul.f32 %v2537, %v2537
      %v2556 = vsel %vm868, %v2554, 0.0
      %v2557 = vrot.slane %v2556, 4
      %v2558 = vadd.f32 %v2556, %v2557
      %v2559 = vrot.slane %v2558, 2
      %v2560 = vadd.f32 %v2558, %v2559
      %v2561 = vrot.slane %v2560, 1
      %v2562 = vadd.f32 %v2560, %v2561
      %v2563 = vsel %vm868, %v2555, 0.0
      %v2564 = vrot.slane %v2563, 4
      %v2565 = vadd.f32 %v2563, %v2564
      %v2566 = vrot.slane %v2565, 2
      %v2567 = vadd.f32 %v2565, %v2566
      %v2568 = vrot.slane %v2567, 1
      %v2569 = vadd.f32 %v2567, %v2568
      %v2570 = vmul.f32 %v2562, 0.125
      %v2571 = vmul.f32 %v2569, 0.125
      %v2572 = vmul.f32 %v2552, %v2552
      %v2573 = vmul.f32 %v2553, %v2553
      %v2574 = vsub.f32 %v2570, %v2572
      %v2575 = vsub.f32 %v2571, %v2573
      %v2576 = vmax.f32 %v2574, 0.0
      %v2577 = vmax.f32 %v2575, 0.0
      %v2578 = vadd.f32 %v2576, 1e-05
      %v2579 = vadd.f32 %v2577, 1e-05
      %v2580 = vrsqrt.pop %v2578
      %v2581 = vrsqrt.pop %v2579
      %v2582 = vmul.f32 %v382, %v2580
      %v2583 = vmul.f32 %v382, %v2581
      %v2584 = vmul.f32 %v2552, %v2582
      %v2585 = vmul.f32 %v2553, %v2583
      %v2588 = vrot.slane %v2584, 7
      %v2589 = vrot.slane %v2585, 7
      %v2592 = vsub.f32 %v382, %v2588
      %v2593 = vsub.f32 %v382, %v2589
      %v2594 = vlaneseq
      %v2595 = vshrl.u32 %v2594, 7
      %v2596 = vsub.s32 4, %v2595
      %v2597 = vrot.slane %v2582, %v2596
      %v2598 = vlaneseq
      %v2599 = vshrl.u32 %v2598, 7
      %v2600 = vsub.s32 4, %v2599
      %v2601 = vrot.slane %v2583, %v2600
      %v2602 = vmul.f32 %v2536, %v2597
      %v2603 = vmul.f32 %v2537, %v2601
      %v2604 = vlaneseq
      %v2605 = vshrl.u32 %v2604, 7
      %v2606 = vsub.s32 5, %v2605
      %v2607 = vrot.slane %v2592, %v2606
      %v2608 = vlaneseq
      %v2609 = vshrl.u32 %v2608, 7
      %v2610 = vsub.s32 5, %v2609
      %v2611 = vrot.slane %v2593, %v2610
      %v2612 = vadd.f32 %v2602, %v2607
      %v2613 = vadd.f32 %v2603, %v2611
      %v2614 = vmax.f32 %v2612, 0.0
      %v2615 = vmax.f32 %v2613, 0.0
      %2616 = vst.msk [vmem:[#allocation2] sm:$0xff] %vm868, %v2614
      %2617 = vst.msk [vmem:[#allocation2 + $0x8] sm:$0xff] %vm868, %v2615
      %2620 = vrot.lane.b32.xlu0 %v965, 32
      %v2621 = vpop.permute.xlu0 %2620
      %2622 = vrot.lane.b32.xlu0 %v966, 32
      %v2623 = vpop.permute.xlu0 %2622
      %vm2626 = vcmask 523520
      %2627 = vst.msk [vmem:[#allocation2] sm:$0xff] %vm2626, %v2621
      %2628 = vst.msk [vmem:[#allocation2 + $0x8] sm:$0xff] %vm2626, %v2623
      %v2629 = vld [vmem:[#allocation2] sm:$0xff]
      %v2630 = vld [vmem:[#allocation2 + $0x8] sm:$0xff]
      %v2631 = vld [vmem:[%s8] sm:$0xff]
      %v2632 = vld [vmem:[%s8 + $0x8] sm:$0xff]
      %v2633 = vld [vmem:[%s8 + $0x10] sm:$0xff]
      %v2634 = vld [vmem:[%s8 + $0x18] sm:$0xff]
      %v2635 = vld [vmem:[%s8 + $0x20] sm:$0xff]
      %v2636 = vld [vmem:[%s8 + $0x28] sm:$0xff]
      %v2637 = vld [vmem:[%s8 + $0x30] sm:$0xff]
      %v2638 = vld [vmem:[%s8 + $0x38] sm:$0xff]
      %v2639 = vld [vmem:[%s9] sm:$0x1]
      %v2641 = vlaneseq
      %v2642 = vshrl.u32 %v2641, 7
      %v2643 = vsub.s32 0, %v2642
      %v2644 = vrot.slane %v2639, %v2643
      %v2647 = vsel %vm447, %v2629, 0
      %v2650 = vsel %vm447, %v2630, 0
      %2652 = vmatprep.subr.mxu0 0.0
      %2653 = vmatpush1.msra.mxu0 %v2631
      %2654 = vmatprep.subr.mxu0 0.0
      %2655 = vmatpush1.msra.mxu0 %v2632
      %2656 = vmatprep.subr.mxu0 0.0
      %2657 = vmatpush1.msra.mxu0 %v2633
      %2658 = vmatprep.subr.mxu0 0.0
      %2659 = vmatpush1.msra.mxu0 %v2634
      %2660 = vmatprep.subr.mxu0 0.0
      %2661 = vmatpush1.msra.mxu0 %v2635
      %2662 = vmatprep.subr.mxu0 0.0
      %2663 = vmatpush1.msra.mxu0 %v2636
      %2664 = vmatprep.subr.mxu0 0.0
      %2665 = vmatpush1.msra.mxu0 %v2637
      %2666 = vmatprep.subr.mxu0 0.0
      %2667 = vmatpush1.msra.mxu0 %v2638
      %2668 = vmatprep.subr.mxu0 0.0
      %2669 = vmatpush1.msra.mxu0 0.0
      %2670 = vmatprep.subr.mxu0 0.0
      %2671 = vmatpush1.msra.mxu0 0.0
      %2672 = vmatprep.subr.mxu0 0.0
      %2673 = vmatpush1.msra.mxu0 0.0
      %2674 = vmatprep.subr.mxu0 0.0
      %2675 = vmatpush1.msra.mxu0 0.0
      %2676 = vmatprep.subr.mxu0 0.0
      %2677 = vmatpush1.msra.mxu0 0.0
      %2678 = vmatprep.subr.mxu0 0.0
      %2679 = vmatpush1.msra.mxu0 0.0
      %2680 = vmatprep.subr.mxu0 0.0
      %2681 = vmatpush1.msra.mxu0 0.0
      %2682 = vmatprep.subr.mxu0 0.0
      %2683 = vmatpush1.msra.mxu0 0.0
      %2684 = vmatprep.subr.mxu0 0.0
      %2685 = vmatpush1.msra.mxu0 0.0
      %2686 = vmatprep.subr.mxu0 0.0
      %2687 = vmatpush1.msra.mxu0 0.0
      %2688 = vmatprep.subr.mxu0 0.0
      %2689 = vmatpush1.msra.mxu0 0.0
      %2690 = vmatprep.subr.mxu0 0.0
      %2691 = vmatpush1.msra.mxu0 0.0
      %2692 = vmatprep.subr.mxu0 0.0
      %2693 = vmatpush1.msra.mxu0 0.0
      %2694 = vmatprep.subr.mxu0 0.0
      %2695 = vmatpush1.msra.mxu0 0.0
      %2696 = vmatprep.subr.mxu0 0.0
      %2697 = vmatpush1.msra.mxu0 0.0
      %2698 = vmatprep.subr.mxu0 0.0
      %2699 = vmatpush1.msra.mxu0 0.0
      %2700 = vmatprep.subr.mxu0 0.0
      %2701 = vmatpush1.msra.mxu0 0.0
      %2702 = vmatprep.subr.mxu0 0.0
      %2703 = vmatpush1.msra.mxu0 0.0
      %2704 = vmatprep.subr.mxu0 0.0
      %2705 = vmatpush1.msra.mxu0 0.0
      %2706 = vmatprep.subr.mxu0 0.0
      %2707 = vmatpush1.msra.mxu0 0.0
      %2708 = vmatprep.subr.mxu0 0.0
      %2709 = vmatpush1.msra.mxu0 0.0
      %2710 = vmatprep.subr.mxu0 0.0
      %2711 = vmatpush1.msra.mxu0 0.0
      %2712 = vmatprep.subr.mxu0 0.0
      %2713 = vmatpush1.msra.mxu0 0.0
      %2714 = vmatprep.subr.mxu0 0.0
      %2715 = vmatpush1.msra.mxu0 0.0
      %2716 = vmatprep.mubr.f32.mxu0 0.0
      %2717 = vmatmul.mubr.f32.gmra.mrb[0].mxu0 %v2647
      %v2718 = vpop.f32.mrb[0].mxu0
      %v2719 = vadd.f32 %v2644, %v2718
      %v2720 = vpop.f32.mrb[0].mxu0
      %2721 = vmatprep.mubr.f32.mxu0 0.0
      %2722 = vmatmul.mubr.f32.gmra.mrb[0].mxu0 %v2650
      %v2723 = vpop.f32.mrb[0].mxu0
      %v2724 = vadd.f32 %v2644, %v2723
      %v2725 = vpop.f32.mrb[0].mxu0
      %2726 = vdwg.mxu0
      %vm2727 = vcmask 23552
      %2728 = vst.msk [vmem:[%s379] sm:$0xff] %vm2727, %v2719
      %2729 = vst.msk [vmem:[%s379 + $0x8] sm:$0xff] %vm2727, %v2724
      %p2730 = scmp.lt.s32.totalorder %s21, 1
      %s2731 = scalar_select %p2730, %s21, 1
      %s2732 = smul.addr %s2731, 2
      %s2733 = smul.addr %s2732, 8
      %s2734 = scalar_lea.vmem %s10, %s2733
      // Predicated region
      $region61: #{model_forward.1} parent=59 // pred_check
        %p2735 = pneg %p259
      $region62: #{model_forward.1} parent=59 // pred_check_branch
        %2737 = sbr.rel (%p2735) target = $region64
      $region63: #{model_forward.1} parent=59 // pred_region
        _
      $region64: #{model_forward.1} parent=59 // pred_fallthru
        _
    $region60: #{model_forward.1} parent=5 // pred_fallthru
      _
    %p2738 = scmp.le.s32.totalorder 2, %s16
    // Predicated region
    $region65: #{model_forward.1} parent=5 // pred_check
      %p2739 = pneg %p2738
    $region66: #{model_forward.1} parent=5 // pred_check_branch
      %2741 = sbr.rel (%p2739) target = $region68
    $region67: #{model_forward.1} parent=5 // pred_region
      %s2742 = ssub.s32 %s16, 2
      // Predicated region
      $region69: #{model_forward.1} parent=67 // pred_check
        %p2743 = pneg %p265
      $region70: #{model_forward.1} parent=67 // pred_check_branch
        %2745 = sbr.rel (%p2743) target = $region72
      $region71: #{model_forward.1} parent=67 // pred_region
        %p2746 = scmp.lt.s32.totalorder %s22, 1
        %s2747 = scalar_select %p2746, %s22, 1
        %s2748 = smul.addr %s2747, 2
        %s2749 = smul.addr %s2748, 8
        %s2750 = scalar_lea.vmem %s10, %s2749
      $region72: #{model_forward.1} parent=67 // pred_fallthru
        _
    $region68: #{model_forward.1} parent=5 // pred_fallthru
      _
  $region6: #{model_forward.1} parent=0 // loop_footer
    %s20 = sadd.s32 1, %s16
  $region7: #{model_forward.1} parent=0 // loop_footer_branch
    %15 = sbr.rel target = $region3
  $region8: #{model_forward.1} parent=0 // loop_exit
    _

</llo_original>
